<compile_context>
chip_gen: v7x
topology: tpu7x:2x2x1
jax: 0.10.0
libtpu: 0.0.40
codegen_flags: <defaults>
</compile_context>

<pallas_src>
import functools

import jax
import jax.numpy as jnp
from jax.experimental import pallas as pl
from jax.experimental.pallas import tpu as pltpu


# ----------------------------------------------------------------------------
# Pallas kernels
# ----------------------------------------------------------------------------
def _gemm_bias_relu_kernel(a_ref, w_ref, b_ref, o_ref):
    """One M-tile of relu(a @ w + b).  f32 accumulation, f32 bias/ReLU."""
    acc = jnp.dot(a_ref[...], w_ref[...], preferred_element_type=jnp.float32)
    o_ref[...] = jnp.maximum(acc + b_ref[...], 0.0).astype(o_ref.dtype)


def _fused_mlp_kernel(x_ref, w1_ref, b1_ref, w2_ref, b2_ref, w3_ref, b3_ref, o_ref):
    """relu(x@W1+b1) -> relu(@W2+b2) -> @W3+b3, all resident in VMEM, one launch."""
    h = jnp.dot(x_ref[...], w1_ref[...], preferred_element_type=jnp.float32)
    h = jnp.maximum(h + b1_ref[...], 0.0)
    h = jnp.dot(h.astype(w2_ref.dtype), w2_ref[...], preferred_element_type=jnp.float32)
    h = jnp.maximum(h + b2_ref[...], 0.0)
    o = jnp.dot(h.astype(w3_ref.dtype), w3_ref[...], preferred_element_type=jnp.float32)
    o_ref[...] = (o + b3_ref[...]).astype(o_ref.dtype)


# ----------------------------------------------------------------------------
# pallas_call wrappers
# ----------------------------------------------------------------------------
def _pick_row_tile(M, target=512):
    """Largest multiple-of-8 divisor of M that is <= target (else full M).
    Full-M fallback keeps block_shape == array shape, which is always legal."""
    if M <= target:
        return M
    for tm in range(target, 7, -8):
        if M % tm == 0:
            return tm
    return M


def conv_gemm_bias_relu(patches, w2d, b2d, *, out_dtype):
    """patches (M, K) x w2d (K, N) + b2d (1, N), ReLU.  Tiled & pipelined over M."""
    M, K = patches.shape
    _, N = w2d.shape
    TM = _pick_row_tile(M)
    isz = patches.dtype.itemsize
    wsz = w2d.dtype.itemsize
    osz = jnp.dtype(out_dtype).itemsize
    cost = pl.CostEstimate(
        flops=2 * M * K * N,
        transcendentals=0,
        bytes_accessed=isz * M * K + wsz * K * N + 4 * N + osz * M * N,
    )
    return pl.pallas_call(
        _gemm_bias_relu_kernel,
        out_shape=jax.ShapeDtypeStruct((M, N), out_dtype),
        grid=(M // TM,),
        in_specs=[
            pl.BlockSpec((TM, K), lambda i: (i, 0)),
            pl.BlockSpec((K, N), lambda i: (0, 0)),   # weights stay resident
            pl.BlockSpec((1, N), lambda i: (0, 0)),
        ],
        out_specs=pl.BlockSpec((TM, N), lambda i: (i, 0)),
        compiler_params=pltpu.CompilerParams(dimension_semantics=("parallel",)),
        cost_estimate=cost,
    )(patches, w2d, b2d)


def fused_mlp(x, w1, b1, w2, b2, w3, b3):
    """Single-launch lin1(+relu) -> lin2(+relu) -> dist.  Output is lane-padded."""
    M, K = x.shape
    H1 = w1.shape[1]
    H2 = w2.shape[1]
    NP = w3.shape[1]          # lane-padded dist width (multiple of 128)
    TM = _pick_row_tile(M)
    wsz = w1.dtype.itemsize
    cost = pl.CostEstimate(
        flops=2 * M * (K * H1 + H1 * H2 + H2 * NP),
        transcendentals=0,
        bytes_accessed=(x.dtype.itemsize * M * K
                        + wsz * (K * H1 + H1 * H2 + H2 * NP)
                        + 4 * (H1 + H2 + NP + M * NP)),
    )
    return pl.pallas_call(
        _fused_mlp_kernel,
        out_shape=jax.ShapeDtypeStruct((M, NP), jnp.float32),
        grid=(M // TM,),
        in_specs=[
            pl.BlockSpec((TM, K), lambda i: (i, 0)),
            pl.BlockSpec((K, H1), lambda i: (0, 0)),
            pl.BlockSpec((1, H1), lambda i: (0, 0)),
            pl.BlockSpec((H1, H2), lambda i: (0, 0)),
            pl.BlockSpec((1, H2), lambda i: (0, 0)),
            pl.BlockSpec((H2, NP), lambda i: (0, 0)),
            pl.BlockSpec((1, NP), lambda i: (0, 0)),
        ],
        out_specs=pl.BlockSpec((TM, NP), lambda i: (i, 0)),
        compiler_params=pltpu.CompilerParams(dimension_semantics=("parallel",)),
        cost_estimate=cost,
    )(x, w1, b1, w2, b2, w3, b3)


# ----------------------------------------------------------------------------
# Conv2d (kernel=4, stride=2, pad=1) via NHWC im2col + Pallas GEMM
# ----------------------------------------------------------------------------
def im2col_nhwc(x, kh, kw, stride, pad):
    """x: (B, H, W, C) -> patches (B*Ho*Wo, kh*kw*C), built directly in (i,j,c) order."""
    B, H, W, C = x.shape
    xp = jnp.pad(x, ((0, 0), (pad, pad), (pad, pad), (0, 0)))
    Ho = (H + 2 * pad - kh) // stride + 1
    Wo = (W + 2 * pad - kw) // stride + 1
    cols = [xp[:, i:i + stride * Ho:stride, j:j + stride * Wo:stride, :]
            for i in range(kh) for j in range(kw)]
    patches = jnp.concatenate(cols, axis=-1)                  # (B, Ho, Wo, kh*kw*C)
    return patches.reshape(B * Ho * Wo, kh * kw * C), Ho, Wo


def conv2d_relu_nhwc(x, w2d, b2d, *, out_dtype):
    """x NHWC, w2d pre-laid-out (kh*kw*C, O), b2d (1, O).  Returns NHWC output."""
    # TODO(synk): patch extraction stays as XLA glue; a fully in-kernel im2col would
    # need in-kernel pad + sublane-strided gathers and is not worth the lowering risk
    # at these sizes.
    B = x.shape[0]
    O = w2d.shape[1]
    patches, Ho, Wo = im2col_nhwc(x, 4, 4, 2, 1)
    y = conv_gemm_bias_relu(patches, w2d, b2d, out_dtype=out_dtype)
    return y.reshape(B, Ho, Wo, O)


# ----------------------------------------------------------------------------
# Parameter construction (PyTorch layout, deterministic) + one-time relayout
# ----------------------------------------------------------------------------
def init_params(key, img_size, latent_dim=10, dist_nparams=2):
    hid_channels = 32
    kernel_size = 4
    hidden_dim = 256
    n_chan = img_size[0]

    def uniform(key, shape, fan_in):
        bound = 1.0 / jnp.sqrt(fan_in)
        return jax.random.uniform(key, shape, jnp.float32, -bound, bound)

    keys = jax.random.split(key, 16)
    p = {}
    p["conv1_w"] = uniform(keys[0], (hid_channels, n_chan, kernel_size, kernel_size),
                           n_chan * kernel_size * kernel_size)
    p["conv1_b"] = uniform(keys[1], (hid_channels,), n_chan * kernel_size * kernel_size)
    fan_c = hid_channels * kernel_size * kernel_size
    p["conv2_w"] = uniform(keys[2], (hid_channels, hid_channels, kernel_size, kernel_size), fan_c)
    p["conv2_b"] = uniform(keys[3], (hid_channels,), fan_c)
    p["conv3_w"] = uniform(keys[4], (hid_channels, hid_channels, kernel_size, kernel_size), fan_c)
    p["conv3_b"] = uniform(keys[5], (hid_channels,), fan_c)
    if img_size[1] == img_size[2] == 64:
        p["conv64_w"] = uniform(keys[6], (hid_channels, hid_channels, kernel_size, kernel_size), fan_c)
        p["conv64_b"] = uniform(keys[7], (hid_channels,), fan_c)
    flat = hid_channels * kernel_size * kernel_size  # 512
    p["lin1_w"] = uniform(keys[8], (hidden_dim, flat), flat)
    p["lin1_b"] = uniform(keys[9], (hidden_dim,), flat)
    p["lin2_w"] = uniform(keys[10], (hidden_dim, hidden_dim), hidden_dim)
    p["lin2_b"] = uniform(keys[11], (hidden_dim,), hidden_dim)
    p["dist_w"] = uniform(keys[12], (latent_dim * dist_nparams, hidden_dim), hidden_dim)
    p["dist_b"] = uniform(keys[13], (latent_dim * dist_nparams,), hidden_dim)
    return p


def prepare_params(p, img_size, latent_dim=10, dist_nparams=2, *, compute_dtype=jnp.float32):
    """One-time relayout: GEMM-ready weights, all transposes/reshapes hoisted out
    of the forward pass.  Biases stay f32 (bias/ReLU always in f32)."""
    kh = kw = 4
    hid = 32
    hidden_dim = 256

    def conv_relayout(w):
        # (O, C, kh, kw) -> (kh, kw, C, O) -> (kh*kw*C, O): matches im2col column order.
        O = w.shape[0]
        return jnp.transpose(w, (2, 3, 1, 0)).reshape(-1, O).astype(compute_dtype)

    q = {}
    names = ["conv1", "conv2", "conv3"]
    if img_size[1] == img_size[2] == 64:
        names.append("conv64")
    q["conv_layers"] = [
        (conv_relayout(p[n + "_w"]), p[n + "_b"].reshape(1, -1).astype(jnp.float32))
        for n in names
    ]

    # lin1: absorb the PyTorch NCHW flatten order into a column permutation so the
    # kernel consumes the NHWC flatten directly; then transpose to (in, out).
    w1 = p["lin1_w"].reshape(hidden_dim, hid, kh, kw)                        # (o, c, h, w)
    w1 = jnp.transpose(w1, (2, 3, 1, 0)).reshape(kh * kw * hid, hidden_dim)  # (h*w*c, o)
    q["lin1_w"] = w1.astype(compute_dtype)
    q["lin1_b"] = p["lin1_b"].reshape(1, -1).astype(jnp.float32)
    q["lin2_w"] = p["lin2_w"].T.astype(compute_dtype)
    q["lin2_b"] = p["lin2_b"].reshape(1, -1).astype(jnp.float32)

    # dist: transpose and lane-pad the output dim to a multiple of 128 (unmasked stores).
    ndist = latent_dim * dist_nparams
    npad = ((ndist + 127) // 128) * 128
    w3 = jnp.pad(p["dist_w"].T, ((0, 0), (0, npad - ndist)))
    q["dist_w"] = w3.astype(compute_dtype)
    q["dist_b"] = jnp.pad(p["dist_b"], (0, npad - ndist)).reshape(1, -1).astype(jnp.float32)
    return q


# ----------------------------------------------------------------------------
# Forward pass (mirrors Encoder.forward)
# ----------------------------------------------------------------------------
def encoder_forward(q, x_nchw, *, latent_dim=10, dist_nparams=2, compute_dtype=jnp.float32):
    batch_size = x_nchw.shape[0]
    # Single layout change for the whole network: NCHW -> NHWC (+ one-time cast).
    x = jnp.transpose(x_nchw, (0, 2, 3, 1)).astype(compute_dtype)
    for w2d, b2d in q["conv_layers"]:
        x = conv2d_relu_nhwc(x, w2d, b2d, out_dtype=compute_dtype)
    # NHWC flatten; lin1_w columns were permuted at init to match this order.
    flat = x.reshape(batch_size, -1)
    out = fused_mlp(flat, q["lin1_w"], q["lin1_b"], q["lin2_w"], q["lin2_b"],
                    q["dist_w"], q["dist_b"])
    stats = out[:, :latent_dim * dist_nparams]
    return {"stats_qzx": stats.reshape(-1, latent_dim, dist_nparams)}


# ----------------------------------------------------------------------------
# Pure-XLA reference (PyTorch semantics) for the f32 correctness check
# ----------------------------------------------------------------------------
def reference_forward(p, x, img_size, latent_dim, dist_nparams):
    hi = jax.lax.Precision.HIGHEST

    def conv(h, w, b):
        y = jax.lax.conv_general_dilated(
            h, w, window_strides=(2, 2), padding=((1, 1), (1, 1)),
            dimension_numbers=("NCHW", "OIHW", "NCHW"), precision=hi)
        return jnp.maximum(y + b[None, :, None, None], 0.0)

    h = conv(x, p["conv1_w"], p["conv1_b"])
    h = conv(h, p["conv2_w"], p["conv2_b"])
    h = conv(h, p["conv3_w"], p["conv3_b"])
    if img_size[1] == img_size[2] == 64:
        h = conv(h, p["conv64_w"], p["conv64_b"])
    flat = h.reshape(h.shape[0], -1)
    a = jnp.maximum(jnp.dot(flat, p["lin1_w"].T, precision=hi) + p["lin1_b"], 0.0)
    a = jnp.maximum(jnp.dot(a, p["lin2_w"].T, precision=hi) + p["lin2_b"], 0.0)
    out = jnp.dot(a, p["dist_w"].T, precision=hi) + p["dist_b"]
    return out.reshape(-1, latent_dim, dist_nparams)


if __name__ == "__main__":
    img_size = (1, 32, 32)   # 32x32 -> no conv_64 branch; flatten = 32*4*4 = 512
    latent_dim = 10
    dist_nparams = 2
    batch = 2

    key = jax.random.PRNGKey(0)
    k_param, k_x = jax.random.split(key)
    params = init_params(k_param, img_size, latent_dim, dist_nparams)
    x = jax.random.normal(k_x, (batch,) + img_size, dtype=jnp.float32)

    # Reference-semantics f32 path.
    q32 = prepare_params(params, img_size, latent_dim, dist_nparams,
                         compute_dtype=jnp.float32)
    fwd32 = jax.jit(functools.partial(encoder_forward, latent_dim=latent_dim,
                                      dist_nparams=dist_nparams,
                                      compute_dtype=jnp.float32))
    out = fwd32(q32, x)
    stats = jax.block_until_ready(out["stats_qzx"])
    assert stats.shape == (batch, latent_dim, dist_nparams), stats.shape
    assert stats.dtype == jnp.float32

    ref = jax.block_until_ready(
        reference_forward(params, x, img_size, latent_dim, dist_nparams))
    max_err = float(jnp.max(jnp.abs(stats - ref)))
    assert jnp.allclose(stats, ref, atol=2e-3, rtol=2e-3), f"max_err={max_err}"

    # bf16-MXU throughput path (f32 accumulation / bias / ReLU / final outputs).
    qbf = prepare_params(params, img_size, latent_dim, dist_nparams,
                         compute_dtype=jnp.bfloat16)
    fwdbf = jax.jit(functools.partial(encoder_forward, latent_dim=latent_dim,
                                      dist_nparams=dist_nparams,
                                      compute_dtype=jnp.bfloat16))
    stats_bf = jax.block_until_ready(fwdbf(qbf, x)["stats_qzx"])
    assert stats_bf.shape == (batch, latent_dim, dist_nparams)

    print("KERNEL_OK")
</pallas_src>

<mosaic_0001>
module attributes {stable_mosaic.version = 11 : i64} {
  func.func @_gemm_bias_relu_kernel(%arg0: i32, %arg1: memref<512x16xf32, #tpu.memory_space<vmem>>, %arg2: memref<16x32xf32, #tpu.memory_space<vmem>>, %arg3: memref<1x32xf32, #tpu.memory_space<vmem>>, %arg4: memref<512x32xf32, #tpu.memory_space<vmem>>) attributes {dimension_semantics = [#tpu.dimension_semantics<parallel>], iteration_bounds = array<i64: 1>, scalar_prefetch = 0 : i64, scratch_operands = 0 : i64, tpu.core_type = #tpu.core_type<tc>, window_params = [{transform_indices = @transform_0, window_bounds = array<i64: 512, 16>}, {pipeline_mode = #tpu.pipeline_mode<synchronous>, transform_indices = @transform_1, window_bounds = array<i64: 16, 32>}, {pipeline_mode = #tpu.pipeline_mode<synchronous>, transform_indices = @transform_2, window_bounds = array<i64: 1, 32>}, {transform_indices = @transform_3, window_bounds = array<i64: 512, 32>}]} {
    %c0 = arith.constant 0 : index
    %c0_0 = arith.constant 0 : index
    %0 = vector.load %arg1[%c0, %c0_0] : memref<512x16xf32, #tpu.memory_space<vmem>>, vector<512x16xf32>
    %c0_1 = arith.constant 0 : index
    %c0_2 = arith.constant 0 : index
    %1 = vector.load %arg2[%c0_1, %c0_2] : memref<16x32xf32, #tpu.memory_space<vmem>>, vector<16x32xf32>
    %cst = arith.constant dense<0.000000e+00> : vector<512x32xf32>
    %2 = tpu.matmul %0, %1, %cst {dimension_numbers = #tpu.dot_dimension_numbers<[1], [0], [0], [1], [0, 0, 1, 1], [], []>} : vector<512x16xf32>, vector<16x32xf32>, vector<512x32xf32> -> vector<512x32xf32>
    %c0_3 = arith.constant 0 : index
    %c0_4 = arith.constant 0 : index
    %3 = vector.load %arg3[%c0_3, %c0_4] : memref<1x32xf32, #tpu.memory_space<vmem>>, vector<1x32xf32>
    %4 = vector.broadcast %3 : vector<1x32xf32> to vector<512x32xf32>
    %5 = arith.addf %2, %4 : vector<512x32xf32>
    %cst_5 = arith.constant 0.000000e+00 : f32
    %6 = vector.broadcast %cst_5 : f32 to vector<512x32xf32>
    %7 = arith.maximumf %5, %6 : vector<512x32xf32>
    %c0_6 = arith.constant 0 : index
    %c0_7 = arith.constant 0 : index
    %8 = vector.load %arg4[%c0_6, %c0_7] : memref<512x32xf32, #tpu.memory_space<vmem>>, vector<512x32xf32>
    tpu.vector_store %arg4[%c0_6, %c0_7], %7 {strides = array<i32>} : memref<512x32xf32, #tpu.memory_space<vmem>>, vector<512x32xf32>,
    return
  }
  func.func @transform_0(%arg0: i32) -> (i32, i32) {
    %c0_i32 = arith.constant 0 : i32
    %c0_i32_0 = arith.constant 0 : i32
    return %arg0, %c0_i32 : i32, i32
  }
  func.func @transform_1(%arg0: i32) -> (i32, i32) {
    %c0_i32 = arith.constant 0 : i32
    %c0_i32_0 = arith.constant 0 : i32
    %c0_i32_1 = arith.constant 0 : i32
    return %c0_i32, %c0_i32_0 : i32, i32
  }
  func.func @transform_2(%arg0: i32) -> (i32, i32) {
    %c0_i32 = arith.constant 0 : i32
    %c0_i32_0 = arith.constant 0 : i32
    %c0_i32_1 = arith.constant 0 : i32
    return %c0_i32, %c0_i32_0 : i32, i32
  }
  func.func @transform_3(%arg0: i32) -> (i32, i32) {
    %c0_i32 = arith.constant 0 : i32
    %c0_i32_0 = arith.constant 0 : i32
    return %arg0, %c0_i32 : i32, i32
  }
}

module attributes {stable_mosaic.version = 11 : i64} {
  func.func @_gemm_bias_relu_kernel(%arg0: i32, %arg1: memref<128x512xf32, #tpu.memory_space<vmem>>, %arg2: memref<512x32xf32, #tpu.memory_space<vmem>>, %arg3: memref<1x32xf32, #tpu.memory_space<vmem>>, %arg4: memref<128x32xf32, #tpu.memory_space<vmem>>) attributes {dimension_semantics = [#tpu.dimension_semantics<parallel>], iteration_bounds = array<i64: 1>, scalar_prefetch = 0 : i64, scratch_operands = 0 : i64, tpu.core_type = #tpu.core_type<tc>, window_params = [{transform_indices = @transform_0, window_bounds = array<i64: 128, 512>}, {pipeline_mode = #tpu.pipeline_mode<synchronous>, transform_indices = @transform_1, window_bounds = array<i64: 512, 32>}, {pipeline_mode = #tpu.pipeline_mode<synchronous>, transform_indices = @transform_2, window_bounds = array<i64: 1, 32>}, {transform_indices = @transform_3, window_bounds = array<i64: 128, 32>}]} {
    %c0 = arith.constant 0 : index
    %c0_0 = arith.constant 0 : index
    %0 = vector.load %arg1[%c0, %c0_0] : memref<128x512xf32, #tpu.memory_space<vmem>>, vector<128x512xf32>
    %c0_1 = arith.constant 0 : index
    %c0_2 = arith.constant 0 : index
    %1 = vector.load %arg2[%c0_1, %c0_2] : memref<512x32xf32, #tpu.memory_space<vmem>>, vector<512x32xf32>
    %cst = arith.constant dense<0.000000e+00> : vector<128x32xf32>
    %2 = tpu.matmul %0, %1, %cst {dimension_numbers = #tpu.dot_dimension_numbers<[1], [0], [0], [1], [0, 0, 1, 1], [], []>} : vector<128x512xf32>, vector<512x32xf32>, vector<128x32xf32> -> vector<128x32xf32>
    %c0_3 = arith.constant 0 : index
    %c0_4 = arith.constant 0 : index
    %3 = vector.load %arg3[%c0_3, %c0_4] : memref<1x32xf32, #tpu.memory_space<vmem>>, vector<1x32xf32>
    %4 = vector.broadcast %3 : vector<1x32xf32> to vector<128x32xf32>
    %5 = arith.addf %2, %4 : vector<128x32xf32>
    %cst_5 = arith.constant 0.000000e+00 : f32
    %6 = vector.broadcast %cst_5 : f32 to vector<128x32xf32>
    %7 = arith.maximumf %5, %6 : vector<128x32xf32>
    %c0_6 = arith.constant 0 : index
    %c0_7 = arith.constant 0 : index
    %8 = vector.load %arg4[%c0_6, %c0_7] : memref<128x32xf32, #tpu.memory_space<vmem>>, vector<128x32xf32>
    tpu.vector_store %arg4[%c0_6, %c0_7], %7 {strides = array<i32>} : memref<128x32xf32, #tpu.memory_space<vmem>>, vector<128x32xf32>,
    return
  }
  func.func @transform_0(%arg0: i32) -> (i32, i32) {
    %c0_i32 = arith.constant 0 : i32
    %c0_i32_0 = arith.constant 0 : i32
    return %arg0, %c0_i32 : i32, i32
  }
  func.func @transform_1(%arg0: i32) -> (i32, i32) {
    %c0_i32 = arith.constant 0 : i32
    %c0_i32_0 = arith.constant 0 : i32
    %c0_i32_1 = arith.constant 0 : i32
    return %c0_i32, %c0_i32_0 : i32, i32
  }
  func.func @transform_2(%arg0: i32) -> (i32, i32) {
    %c0_i32 = arith.constant 0 : i32
    %c0_i32_0 = arith.constant 0 : i32
    %c0_i32_1 = arith.constant 0 : i32
    return %c0_i32, %c0_i32_0 : i32, i32
  }
  func.func @transform_3(%arg0: i32) -> (i32, i32) {
    %c0_i32 = arith.constant 0 : i32
    %c0_i32_0 = arith.constant 0 : i32
    return %arg0, %c0_i32 : i32, i32
  }
}

module attributes {stable_mosaic.version = 11 : i64} {
  func.func @_gemm_bias_relu_kernel(%arg0: i32, %arg1: memref<32x512xf32, #tpu.memory_space<vmem>>, %arg2: memref<512x32xf32, #tpu.memory_space<vmem>>, %arg3: memref<1x32xf32, #tpu.memory_space<vmem>>, %arg4: memref<32x32xf32, #tpu.memory_space<vmem>>) attributes {dimension_semantics = [#tpu.dimension_semantics<parallel>], iteration_bounds = array<i64: 1>, scalar_prefetch = 0 : i64, scratch_operands = 0 : i64, tpu.core_type = #tpu.core_type<tc>, window_params = [{transform_indices = @transform_0, window_bounds = array<i64: 32, 512>}, {pipeline_mode = #tpu.pipeline_mode<synchronous>, transform_indices = @transform_1, window_bounds = array<i64: 512, 32>}, {pipeline_mode = #tpu.pipeline_mode<synchronous>, transform_indices = @transform_2, window_bounds = array<i64: 1, 32>}, {transform_indices = @transform_3, window_bounds = array<i64: 32, 32>}]} {
    %c0 = arith.constant 0 : index
    %c0_0 = arith.constant 0 : index
    %0 = vector.load %arg1[%c0, %c0_0] : memref<32x512xf32, #tpu.memory_space<vmem>>, vector<32x512xf32>
    %c0_1 = arith.constant 0 : index
    %c0_2 = arith.constant 0 : index
    %1 = vector.load %arg2[%c0_1, %c0_2] : memref<512x32xf32, #tpu.memory_space<vmem>>, vector<512x32xf32>
    %cst = arith.constant dense<0.000000e+00> : vector<32x32xf32>
    %2 = tpu.matmul %0, %1, %cst {dimension_numbers = #tpu.dot_dimension_numbers<[1], [0], [0], [1], [0, 0, 1, 1], [], []>} : vector<32x512xf32>, vector<512x32xf32>, vector<32x32xf32> -> vector<32x32xf32>
    %c0_3 = arith.constant 0 : index
    %c0_4 = arith.constant 0 : index
    %3 = vector.load %arg3[%c0_3, %c0_4] : memref<1x32xf32, #tpu.memory_space<vmem>>, vector<1x32xf32>
    %4 = vector.broadcast %3 : vector<1x32xf32> to vector<32x32xf32>
    %5 = arith.addf %2, %4 : vector<32x32xf32>
    %cst_5 = arith.constant 0.000000e+00 : f32
    %6 = vector.broadcast %cst_5 : f32 to vector<32x32xf32>
    %7 = arith.maximumf %5, %6 : vector<32x32xf32>
    %c0_6 = arith.constant 0 : index
    %c0_7 = arith.constant 0 : index
    %8 = vector.load %arg4[%c0_6, %c0_7] : memref<32x32xf32, #tpu.memory_space<vmem>>, vector<32x32xf32>
    tpu.vector_store %arg4[%c0_6, %c0_7], %7 {strides = array<i32>} : memref<32x32xf32, #tpu.memory_space<vmem>>, vector<32x32xf32>,
    return
  }
  func.func @transform_0(%arg0: i32) -> (i32, i32) {
    %c0_i32 = arith.constant 0 : i32
    %c0_i32_0 = arith.constant 0 : i32
    return %arg0, %c0_i32 : i32, i32
  }
  func.func @transform_1(%arg0: i32) -> (i32, i32) {
    %c0_i32 = arith.constant 0 : i32
    %c0_i32_0 = arith.constant 0 : i32
    %c0_i32_1 = arith.constant 0 : i32
    return %c0_i32, %c0_i32_0 : i32, i32
  }
  func.func @transform_2(%arg0: i32) -> (i32, i32) {
    %c0_i32 = arith.constant 0 : i32
    %c0_i32_0 = arith.constant 0 : i32
    %c0_i32_1 = arith.constant 0 : i32
    return %c0_i32, %c0_i32_0 : i32, i32
  }
  func.func @transform_3(%arg0: i32) -> (i32, i32) {
    %c0_i32 = arith.constant 0 : i32
    %c0_i32_0 = arith.constant 0 : i32
    return %arg0, %c0_i32 : i32, i32
  }
}

module attributes {stable_mosaic.version = 11 : i64} {
  func.func @_fused_mlp_kernel(%arg0: i32, %arg1: memref<2x512xf32, #tpu.memory_space<vmem>>, %arg2: memref<512x256xf32, #tpu.memory_space<vmem>>, %arg3: memref<1x256xf32, #tpu.memory_space<vmem>>, %arg4: memref<256x256xf32, #tpu.memory_space<vmem>>, %arg5: memref<1x256xf32, #tpu.memory_space<vmem>>, %arg6: memref<256x128xf32, #tpu.memory_space<vmem>>, %arg7: memref<1x128xf32, #tpu.memory_space<vmem>>, %arg8: memref<2x128xf32, #tpu.memory_space<vmem>>) attributes {dimension_semantics = [#tpu.dimension_semantics<parallel>], iteration_bounds = array<i64: 1>, scalar_prefetch = 0 : i64, scratch_operands = 0 : i64, tpu.core_type = #tpu.core_type<tc>, window_params = [{transform_indices = @transform_0, window_bounds = array<i64: 2, 512>}, {pipeline_mode = #tpu.pipeline_mode<synchronous>, transform_indices = @transform_1, window_bounds = array<i64: 512, 256>}, {pipeline_mode = #tpu.pipeline_mode<synchronous>, transform_indices = @transform_2, window_bounds = array<i64: 1, 256>}, {pipeline_mode = #tpu.pipeline_mode<synchronous>, transform_indices = @transform_3, window_bounds = array<i64: 256, 256>}, {pipeline_mode = #tpu.pipeline_mode<synchronous>, transform_indices = @transform_4, window_bounds = array<i64: 1, 256>}, {pipeline_mode = #tpu.pipeline_mode<synchronous>, transform_indices = @transform_5, window_bounds = array<i64: 256, 128>}, {pipeline_mode = #tpu.pipeline_mode<synchronous>, transform_indices = @transform_6, window_bounds = array<i64: 1, 128>}, {transform_indices = @transform_7, window_bounds = array<i64: 2, 128>}]} {
    %c0 = arith.constant 0 : index
    %c0_0 = arith.constant 0 : index
    %0 = vector.load %arg1[%c0, %c0_0] : memref<2x512xf32, #tpu.memory_space<vmem>>, vector<2x512xf32>
    %c0_1 = arith.constant 0 : index
    %c0_2 = arith.constant 0 : index
    %1 = vector.load %arg2[%c0_1, %c0_2] : memref<512x256xf32, #tpu.memory_space<vmem>>, vector<512x256xf32>
    %cst = arith.constant dense<0.000000e+00> : vector<2x256xf32>
    %2 = tpu.matmul %0, %1, %cst {dimension_numbers = #tpu.dot_dimension_numbers<[1], [0], [0], [1], [0, 0, 1, 1], [], []>} : vector<2x512xf32>, vector<512x256xf32>, vector<2x256xf32> -> vector<2x256xf32>
    %c0_3 = arith.constant 0 : index
    %c0_4 = arith.constant 0 : index
    %3 = vector.load %arg3[%c0_3, %c0_4] : memref<1x256xf32, #tpu.memory_space<vmem>>, vector<1x256xf32>
    %4 = vector.broadcast %3 : vector<1x256xf32> to vector<2x256xf32>
    %5 = arith.addf %2, %4 : vector<2x256xf32>
    %cst_5 = arith.constant 0.000000e+00 : f32
    %6 = vector.broadcast %cst_5 : f32 to vector<2x256xf32>
    %7 = arith.maximumf %5, %6 : vector<2x256xf32>
    %c0_6 = arith.constant 0 : index
    %c0_7 = arith.constant 0 : index
    %8 = vector.load %arg4[%c0_6, %c0_7] : memref<256x256xf32, #tpu.memory_space<vmem>>, vector<256x256xf32>
    %cst_8 = arith.constant dense<0.000000e+00> : vector<2x256xf32>
    %9 = tpu.matmul %7, %8, %cst_8 {dimension_numbers = #tpu.dot_dimension_numbers<[1], [0], [0], [1], [0, 0, 1, 1], [], []>} : vector<2x256xf32>, vector<256x256xf32>, vector<2x256xf32> -> vector<2x256xf32>
    %c0_9 = arith.constant 0 : index
    %c0_10 = arith.constant 0 : index
    %10 = vector.load %arg5[%c0_9, %c0_10] : memref<1x256xf32, #tpu.memory_space<vmem>>, vector<1x256xf32>
    %11 = vector.broadcast %10 : vector<1x256xf32> to vector<2x256xf32>
    %12 = arith.addf %9, %11 : vector<2x256xf32>
    %cst_11 = arith.constant 0.000000e+00 : f32
    %13 = vector.broadcast %cst_11 : f32 to vector<2x256xf32>
    %14 = arith.maximumf %12, %13 : vector<2x256xf32>
    %c0_12 = arith.constant 0 : index
    %c0_13 = arith.constant 0 : index
    %15 = vector.load %arg6[%c0_12, %c0_13] : memref<256x128xf32, #tpu.memory_space<vmem>>, vector<256x128xf32>
    %cst_14 = arith.constant dense<0.000000e+00> : vector<2x128xf32>
    %16 = tpu.matmul %14, %15, %cst_14 {dimension_numbers = #tpu.dot_dimension_numbers<[1], [0], [0], [1], [0, 0, 1, 1], [], []>} : vector<2x256xf32>, vector<256x128xf32>, vector<2x128xf32> -> vector<2x128xf32>
    %c0_15 = arith.constant 0 : index
    %c0_16 = arith.constant 0 : index
    %17 = vector.load %arg7[%c0_15, %c0_16] : memref<1x128xf32, #tpu.memory_space<vmem>>, vector<1x128xf32>
    %18 = vector.broadcast %17 : vector<1x128xf32> to vector<2x128xf32>
    %19 = arith.addf %16, %18 : vector<2x128xf32>
    %c0_17 = arith.constant 0 : index
    %c0_18 = arith.constant 0 : index
    %20 = vector.load %arg8[%c0_17, %c0_18] : memref<2x128xf32, #tpu.memory_space<vmem>>, vector<2x128xf32>
    tpu.vector_store %arg8[%c0_17, %c0_18], %19 {strides = array<i32>} : memref<2x128xf32, #tpu.memory_space<vmem>>, vector<2x128xf32>,
    return
  }
  func.func @transform_0(%arg0: i32) -> (i32, i32) {
    %c0_i32 = arith.constant 0 : i32
    %c0_i32_0 = arith.constant 0 : i32
    return %arg0, %c0_i32 : i32, i32
  }
  func.func @transform_1(%arg0: i32) -> (i32, i32) {
    %c0_i32 = arith.constant 0 : i32
    %c0_i32_0 = arith.constant 0 : i32
    %c0_i32_1 = arith.constant 0 : i32
    return %c0_i32, %c0_i32_0 : i32, i32
  }
  func.func @transform_2(%arg0: i32) -> (i32, i32) {
    %c0_i32 = arith.constant 0 : i32
    %c0_i32_0 = arith.constant 0 : i32
    %c0_i32_1 = arith.constant 0 : i32
    return %c0_i32, %c0_i32_0 : i32, i32
  }
  func.func @transform_3(%arg0: i32) -> (i32, i32) {
    %c0_i32 = arith.constant 0 : i32
    %c0_i32_0 = arith.constant 0 : i32
    %c0_i32_1 = arith.constant 0 : i32
    return %c0_i32, %c0_i32_0 : i32, i32
  }
  func.func @transform_4(%arg0: i32) -> (i32, i32) {
    %c0_i32 = arith.constant 0 : i32
    %c0_i32_0 = arith.constant 0 : i32
    %c0_i32_1 = arith.constant 0 : i32
    return %c0_i32, %c0_i32_0 : i32, i32
  }
  func.func @transform_5(%arg0: i32) -> (i32, i32) {
    %c0_i32 = arith.constant 0 : i32
    %c0_i32_0 = arith.constant 0 : i32
    %c0_i32_1 = arith.constant 0 : i32
    return %c0_i32, %c0_i32_0 : i32, i32
  }
  func.func @transform_6(%arg0: i32) -> (i32, i32) {
    %c0_i32 = arith.constant 0 : i32
    %c0_i32_0 = arith.constant 0 : i32
    %c0_i32_1 = arith.constant 0 : i32
    return %c0_i32, %c0_i32_0 : i32, i32
  }
  func.func @transform_7(%arg0: i32) -> (i32, i32) {
    %c0_i32 = arith.constant 0 : i32
    %c0_i32_0 = arith.constant 0 : i32
    return %arg0, %c0_i32 : i32, i32
  }
}

</mosaic_0001>

<llo_original>
// kernel: encoder_forward.4
$region0: #{encoder_forward.4}
  #allocation0 [shape = 'u32[]', space=smem, size = 0x4, offset = 0x4, fixed_abs, tag = 'smem constant byte address 0x4 - core index']
  #allocation1 [shape = 'u32[144,128]{1,0:T(1,128)}', space=vmem, size = 0x12000, scoped, tag = 'internal scratch']
  %s0 = inlined_call_operand.vmem [shape: f32[512,16], index: 0, kind: input, shape index: {}]
  %s1 = inlined_call_operand.vmem [shape: f32[16,32], index: 1, kind: input, shape index: {}]
  %s2 = inlined_call_operand.vmem [shape: f32[1,32], index: 2, kind: input, shape index: {}]
  %s3 = inlined_call_operand.vmem [shape: f32[512,32], index: 3, kind: output, shape index: {}]
  %s4 = sld [smem:[#allocation0]]
  $region22: #{encoder_forward.4} parent=0
    _
  %s6 = ssub.s32 1, %s4
  %s7 = scalar_select 0, %s6, %s4
  // Predicated region
  $region2: #{encoder_forward.4} parent=0 // pred_check
    _
  $region3: #{encoder_forward.4} parent=0 // pred_check_branch
    %9 = sbr.rel (0) target = $region5
  $region4: #{encoder_forward.4} parent=0 // pred_region
    _
  $region5: #{encoder_forward.4} parent=0 // pred_fallthru
    _
  // Predicated region
  $region6: #{encoder_forward.4} parent=0 // pred_check
    _
  $region7: #{encoder_forward.4} parent=0 // pred_check_branch
    %11 = sbr.rel (0) target = $region9
  $region8: #{encoder_forward.4} parent=0 // pred_region
    _
  $region9: #{encoder_forward.4} parent=0 // pred_fallthru
    _
  // Predicated region
  $region10: #{encoder_forward.4} parent=0 // pred_check
    _
  $region11: #{encoder_forward.4} parent=0 // pred_check_branch
    %13 = sbr.rel (0) target = $region13
  $region12: #{encoder_forward.4} parent=0 // pred_region
    _
  $region13: #{encoder_forward.4} parent=0 // pred_fallthru
    _
  %v14 = vld [vmem:[%s0] sm:$0xff]
  %v15 = vld [vmem:[%s0 + $0x8] sm:$0xff]
  %v16 = vld [vmem:[%s0 + $0x10] sm:$0xff]
  %v17 = vld [vmem:[%s0 + $0x18] sm:$0xff]
  %v18 = vld [vmem:[%s0 + $0x20] sm:$0xff]
  %v19 = vld [vmem:[%s0 + $0x28] sm:$0xff]
  %v20 = vld [vmem:[%s0 + $0x30] sm:$0xff]
  %v21 = vld [vmem:[%s0 + $0x38] sm:$0xff]
  %v22 = vld [vmem:[%s0 + $0x40] sm:$0xff]
  %v23 = vld [vmem:[%s0 + $0x48] sm:$0xff]
  %v24 = vld [vmem:[%s0 + $0x50] sm:$0xff]
  %v25 = vld [vmem:[%s0 + $0x58] sm:$0xff]
  %v26 = vld [vmem:[%s0 + $0x60] sm:$0xff]
  %v27 = vld [vmem:[%s0 + $0x68] sm:$0xff]
  %v28 = vld [vmem:[%s0 + $0x70] sm:$0xff]
  %v29 = vld [vmem:[%s0 + $0x78] sm:$0xff]
  %v30 = vld [vmem:[%s0 + $0x80] sm:$0xff]
  %v31 = vld [vmem:[%s0 + $0x88] sm:$0xff]
  %v32 = vld [vmem:[%s0 + $0x90] sm:$0xff]
  %v33 = vld [vmem:[%s0 + $0x98] sm:$0xff]
  %v34 = vld [vmem:[%s0 + $0xa0] sm:$0xff]
  %v35 = vld [vmem:[%s0 + $0xa8] sm:$0xff]
  %v36 = vld [vmem:[%s0 + $0xb0] sm:$0xff]
  %v37 = vld [vmem:[%s0 + $0xb8] sm:$0xff]
  %v38 = vld [vmem:[%s0 + $0xc0] sm:$0xff]
  %v39 = vld [vmem:[%s0 + $0xc8] sm:$0xff]
  %v40 = vld [vmem:[%s0 + $0xd0] sm:$0xff]
  %v41 = vld [vmem:[%s0 + $0xd8] sm:$0xff]
  %v42 = vld [vmem:[%s0 + $0xe0] sm:$0xff]
  %v43 = vld [vmem:[%s0 + $0xe8] sm:$0xff]
  %v44 = vld [vmem:[%s0 + $0xf0] sm:$0xff]
  %v45 = vld [vmem:[%s0 + $0xf8] sm:$0xff]
  %v46 = vld [vmem:[%s0 + $0x100] sm:$0xff]
  %v47 = vld [vmem:[%s0 + $0x108] sm:$0xff]
  %v48 = vld [vmem:[%s0 + $0x110] sm:$0xff]
  %v49 = vld [vmem:[%s0 + $0x118] sm:$0xff]
  %v50 = vld [vmem:[%s0 + $0x120] sm:$0xff]
  %v51 = vld [vmem:[%s0 + $0x128] sm:$0xff]
  %v52 = vld [vmem:[%s0 + $0x130] sm:$0xff]
  %v53 = vld [vmem:[%s0 + $0x138] sm:$0xff]
  %v54 = vld [vmem:[%s0 + $0x140] sm:$0xff]
  %v55 = vld [vmem:[%s0 + $0x148] sm:$0xff]
  %v56 = vld [vmem:[%s0 + $0x150] sm:$0xff]
  %v57 = vld [vmem:[%s0 + $0x158] sm:$0xff]
  %v58 = vld [vmem:[%s0 + $0x160] sm:$0xff]
  %v59 = vld [vmem:[%s0 + $0x168] sm:$0xff]
  %v60 = vld [vmem:[%s0 + $0x170] sm:$0xff]
  %v61 = vld [vmem:[%s0 + $0x178] sm:$0xff]
  %v62 = vld [vmem:[%s0 + $0x180] sm:$0xff]
  %v63 = vld [vmem:[%s0 + $0x188] sm:$0xff]
  %v64 = vld [vmem:[%s0 + $0x190] sm:$0xff]
  %v65 = vld [vmem:[%s0 + $0x198] sm:$0xff]
  %v66 = vld [vmem:[%s0 + $0x1a0] sm:$0xff]
  %v67 = vld [vmem:[%s0 + $0x1a8] sm:$0xff]
  %v68 = vld [vmem:[%s0 + $0x1b0] sm:$0xff]
  %v69 = vld [vmem:[%s0 + $0x1b8] sm:$0xff]
  %v70 = vld [vmem:[%s0 + $0x1c0] sm:$0xff]
  %v71 = vld [vmem:[%s0 + $0x1c8] sm:$0xff]
  %v72 = vld [vmem:[%s0 + $0x1d0] sm:$0xff]
  %v73 = vld [vmem:[%s0 + $0x1d8] sm:$0xff]
  %v74 = vld [vmem:[%s0 + $0x1e0] sm:$0xff]
  %v75 = vld [vmem:[%s0 + $0x1e8] sm:$0xff]
  %v76 = vld [vmem:[%s0 + $0x1f0] sm:$0xff]
  %v77 = vld [vmem:[%s0 + $0x1f8] sm:$0xff]
  %v78 = vld [vmem:[%s1] sm:$0xff]
  %v79 = vld [vmem:[%s1 + $0x8] sm:$0xff]
  %v80 = vld [vmem:[%s2] sm:$0x1]
  %v82 = vlaneseq
  %v83 = vshrl.u32 %v82, 7
  %v84 = vsub.s32 0, %v83
  %v85 = vrot.slane %v80, %v84
  %vm87 = vcmask 130048
  %v89 = vsel %vm87, %v14, 0
  %v92 = vsel %vm87, %v15, 0
  %v95 = vsel %vm87, %v16, 0
  %v98 = vsel %vm87, %v17, 0
  %v101 = vsel %vm87, %v18, 0
  %v104 = vsel %vm87, %v19, 0
  %v107 = vsel %vm87, %v20, 0
  %v110 = vsel %vm87, %v21, 0
  %v113 = vsel %vm87, %v22, 0
  %v116 = vsel %vm87, %v23, 0
  %v119 = vsel %vm87, %v24, 0
  %v122 = vsel %vm87, %v25, 0
  %v125 = vsel %vm87, %v26, 0
  %v128 = vsel %vm87, %v27, 0
  %v131 = vsel %vm87, %v28, 0
  %v134 = vsel %vm87, %v29, 0
  %v137 = vsel %vm87, %v30, 0
  %v140 = vsel %vm87, %v31, 0
  %v143 = vsel %vm87, %v32, 0
  %v146 = vsel %vm87, %v33, 0
  %v149 = vsel %vm87, %v34, 0
  %v152 = vsel %vm87, %v35, 0
  %v155 = vsel %vm87, %v36, 0
  %v158 = vsel %vm87, %v37, 0
  %v161 = vsel %vm87, %v38, 0
  %v164 = vsel %vm87, %v39, 0
  %v167 = vsel %vm87, %v40, 0
  %v170 = vsel %vm87, %v41, 0
  %v173 = vsel %vm87, %v42, 0
  %v176 = vsel %vm87, %v43, 0
  %v179 = vsel %vm87, %v44, 0
  %v182 = vsel %vm87, %v45, 0
  %v185 = vsel %vm87, %v46, 0
  %v188 = vsel %vm87, %v47, 0
  %v191 = vsel %vm87, %v48, 0
  %v194 = vsel %vm87, %v49, 0
  %v197 = vsel %vm87, %v50, 0
  %v200 = vsel %vm87, %v51, 0
  %v203 = vsel %vm87, %v52, 0
  %v206 = vsel %vm87, %v53, 0
  %v209 = vsel %vm87, %v54, 0
  %v212 = vsel %vm87, %v55, 0
  %v215 = vsel %vm87, %v56, 0
  %v218 = vsel %vm87, %v57, 0
  %v221 = vsel %vm87, %v58, 0
  %v224 = vsel %vm87, %v59, 0
  %v227 = vsel %vm87, %v60, 0
  %v230 = vsel %vm87, %v61, 0
  %v233 = vsel %vm87, %v62, 0
  %v236 = vsel %vm87, %v63, 0
  %v239 = vsel %vm87, %v64, 0
  %v242 = vsel %vm87, %v65, 0
  %v245 = vsel %vm87, %v66, 0
  %v248 = vsel %vm87, %v67, 0
  %v251 = vsel %vm87, %v68, 0
  %v254 = vsel %vm87, %v69, 0
  %v257 = vsel %vm87, %v70, 0
  %v260 = vsel %vm87, %v71, 0
  %v263 = vsel %vm87, %v72, 0
  %v266 = vsel %vm87, %v73, 0
  %v269 = vsel %vm87, %v74, 0
  %v272 = vsel %vm87, %v75, 0
  %v275 = vsel %vm87, %v76, 0
  %v278 = vsel %vm87, %v77, 0
  %280 = vmatprep.subr.mxu0 0.0
  %281 = vmatpush1.msra.mxu0 %v78
  %282 = vmatprep.subr.mxu0 0.0
  %283 = vmatpush1.msra.mxu0 %v79
  %284 = vmatprep.subr.mxu0 0.0
  %285 = vmatpush1.msra.mxu0 0.0
  %286 = vmatprep.subr.mxu0 0.0
  %287 = vmatpush1.msra.mxu0 0.0
  %288 = vmatprep.subr.mxu0 0.0
  %289 = vmatpush1.msra.mxu0 0.0
  %290 = vmatprep.subr.mxu0 0.0
  %291 = vmatpush1.msra.mxu0 0.0
  %292 = vmatprep.subr.mxu0 0.0
  %293 = vmatpush1.msra.mxu0 0.0
  %294 = vmatprep.subr.mxu0 0.0
  %295 = vmatpush1.msra.mxu0 0.0
  %296 = vmatprep.subr.mxu0 0.0
  %297 = vmatpush1.msra.mxu0 0.0
  %298 = vmatprep.subr.mxu0 0.0
  %299 = vmatpush1.msra.mxu0 0.0
  %300 = vmatprep.subr.mxu0 0.0
  %301 = vmatpush1.msra.mxu0 0.0
  %302 = vmatprep.subr.mxu0 0.0
  %303 = vmatpush1.msra.mxu0 0.0
  %304 = vmatprep.subr.mxu0 0.0
  %305 = vmatpush1.msra.mxu0 0.0
  %306 = vmatprep.subr.mxu0 0.0
  %307 = vmatpush1.msra.mxu0 0.0
  %308 = vmatprep.subr.mxu0 0.0
  %309 = vmatpush1.msra.mxu0 0.0
  %310 = vmatprep.subr.mxu0 0.0
  %311 = vmatpush1.msra.mxu0 0.0
  %312 = vmatprep.subr.mxu0 0.0
  %313 = vmatpush1.msra.mxu0 0.0
  %314 = vmatprep.subr.mxu0 0.0
  %315 = vmatpush1.msra.mxu0 0.0
  %316 = vmatprep.subr.mxu0 0.0
  %317 = vmatpush1.msra.mxu0 0.0
  %318 = vmatprep.subr.mxu0 0.0
  %319 = vmatpush1.msra.mxu0 0.0
  %320 = vmatprep.subr.mxu0 0.0
  %321 = vmatpush1.msra.mxu0 0.0
  %322 = vmatprep.subr.mxu0 0.0
  %323 = vmatpush1.msra.mxu0 0.0
  %324 = vmatprep.subr.mxu0 0.0
  %325 = vmatpush1.msra.mxu0 0.0
  %326 = vmatprep.subr.mxu0 0.0
  %327 = vmatpush1.msra.mxu0 0.0
  %328 = vmatprep.subr.mxu0 0.0
  %329 = vmatpush1.msra.mxu0 0.0
  %330 = vmatprep.subr.mxu0 0.0
  %331 = vmatpush1.msra.mxu0 0.0
  %332 = vmatprep.subr.mxu0 0.0
  %333 = vmatpush1.msra.mxu0 0.0
  %334 = vmatprep.subr.mxu0 0.0
  %335 = vmatpush1.msra.mxu0 0.0
  %336 = vmatprep.subr.mxu0 0.0
  %337 = vmatpush1.msra.mxu0 0.0
  %338 = vmatprep.subr.mxu0 0.0
  %339 = vmatpush1.msra.mxu0 0.0
  %340 = vmatprep.subr.mxu0 0.0
  %341 = vmatpush1.msra.mxu0 0.0
  %342 = vmatprep.subr.mxu0 0.0
  %343 = vmatpush1.msra.mxu0 0.0
  %344 = vmatprep.mubr.f32.mxu0 0.0
  %345 = vmatmul.mubr.f32.gmra.mrb[0].mxu0 %v89
  %v346 = vpop.f32.mrb[0].mxu0
  %v347 = vadd.f32 %v85, %v346
  %v348 = vpop.f32.mrb[0].mxu0
  %349 = vmatprep.mubr.f32.mxu0 0.0
  %350 = vmatmul.mubr.f32.gmra.mrb[0].mxu0 %v92
  %v351 = vpop.f32.mrb[0].mxu0
  %v352 = vadd.f32 %v85, %v351
  %v353 = vpop.f32.mrb[0].mxu0
  %354 = vmatprep.mubr.f32.mxu0 0.0
  %355 = vmatmul.mubr.f32.gmra.mrb[0].mxu0 %v95
  %v356 = vpop.f32.mrb[0].mxu0
  %v357 = vadd.f32 %v85, %v356
  %v358 = vpop.f32.mrb[0].mxu0
  %359 = vmatprep.mubr.f32.mxu0 0.0
  %360 = vmatmul.mubr.f32.gmra.mrb[0].mxu0 %v98
  %v361 = vpop.f32.mrb[0].mxu0
  %v362 = vadd.f32 %v85, %v361
  %v363 = vpop.f32.mrb[0].mxu0
  %364 = vmatprep.mubr.f32.mxu0 0.0
  %365 = vmatmul.mubr.f32.gmra.mrb[0].mxu0 %v101
  %v366 = vpop.f32.mrb[0].mxu0
  %v367 = vadd.f32 %v85, %v366
  %v368 = vpop.f32.mrb[0].mxu0
  %369 = vmatprep.mubr.f32.mxu0 0.0
  %370 = vmatmul.mubr.f32.gmra.mrb[0].mxu0 %v104
  %v371 = vpop.f32.mrb[0].mxu0
  %v372 = vadd.f32 %v85, %v371
  %v373 = vpop.f32.mrb[0].mxu0
  %374 = vmatprep.mubr.f32.mxu0 0.0
  %375 = vmatmul.mubr.f32.gmra.mrb[0].mxu0 %v107
  %v376 = vpop.f32.mrb[0].mxu0
  %v377 = vadd.f32 %v85, %v376
  %v378 = vpop.f32.mrb[0].mxu0
  %379 = vmatprep.mubr.f32.mxu0 0.0
  %380 = vmatmul.mubr.f32.gmra.mrb[0].mxu0 %v110
  %v381 = vpop.f32.mrb[0].mxu0
  %v382 = vadd.f32 %v85, %v381
  %v383 = vpop.f32.mrb[0].mxu0
  %384 = vmatprep.mubr.f32.mxu0 0.0
  %385 = vmatmul.mubr.f32.gmra.mrb[0].mxu0 %v113
  %v386 = vpop.f32.mrb[0].mxu0
  %v387 = vadd.f32 %v85, %v386
  %v388 = vpop.f32.mrb[0].mxu0
  %389 = vmatprep.mubr.f32.mxu0 0.0
  %390 = vmatmul.mubr.f32.gmra.mrb[0].mxu0 %v116
  %v391 = vpop.f32.mrb[0].mxu0
  %v392 = vadd.f32 %v85, %v391
  %v393 = vpop.f32.mrb[0].mxu0
  %394 = vmatprep.mubr.f32.mxu0 0.0
  %395 = vmatmul.mubr.f32.gmra.mrb[0].mxu0 %v119
  %v396 = vpop.f32.mrb[0].mxu0
  %v397 = vadd.f32 %v85, %v396
  %v398 = vpop.f32.mrb[0].mxu0
  %399 = vmatprep.mubr.f32.mxu0 0.0
  %400 = vmatmul.mubr.f32.gmra.mrb[0].mxu0 %v122
  %v401 = vpop.f32.mrb[0].mxu0
  %v402 = vadd.f32 %v85, %v401
  %v403 = vpop.f32.mrb[0].mxu0
  %404 = vmatprep.mubr.f32.mxu0 0.0
  %405 = vmatmul.mubr.f32.gmra.mrb[0].mxu0 %v125
  %v406 = vpop.f32.mrb[0].mxu0
  %v407 = vadd.f32 %v85, %v406
  %v408 = vpop.f32.mrb[0].mxu0
  %409 = vmatprep.mubr.f32.mxu0 0.0
  %410 = vmatmul.mubr.f32.gmra.mrb[0].mxu0 %v128
  %v411 = vpop.f32.mrb[0].mxu0
  %v412 = vadd.f32 %v85, %v411
  %v413 = vpop.f32.mrb[0].mxu0
  %414 = vmatprep.mubr.f32.mxu0 0.0
  %415 = vmatmul.mubr.f32.gmra.mrb[0].mxu0 %v131
  %v416 = vpop.f32.mrb[0].mxu0
  %v417 = vadd.f32 %v85, %v416
  %v418 = vpop.f32.mrb[0].mxu0
  %419 = vmatprep.mubr.f32.mxu0 0.0
  %420 = vmatmul.mubr.f32.gmra.mrb[0].mxu0 %v134
  %v421 = vpop.f32.mrb[0].mxu0
  %v422 = vadd.f32 %v85, %v421
  %v423 = vpop.f32.mrb[0].mxu0
  %424 = vmatprep.mubr.f32.mxu0 0.0
  %425 = vmatmul.mubr.f32.gmra.mrb[0].mxu0 %v137
  %v426 = vpop.f32.mrb[0].mxu0
  %v427 = vadd.f32 %v85, %v426
  %v428 = vpop.f32.mrb[0].mxu0
  %429 = vmatprep.mubr.f32.mxu0 0.0
  %430 = vmatmul.mubr.f32.gmra.mrb[0].mxu0 %v140
  %v431 = vpop.f32.mrb[0].mxu0
  %v432 = vadd.f32 %v85, %v431
  %v433 = vpop.f32.mrb[0].mxu0
  %434 = vmatprep.mubr.f32.mxu0 0.0
  %435 = vmatmul.mubr.f32.gmra.mrb[0].mxu0 %v143
  %v436 = vpop.f32.mrb[0].mxu0
  %v437 = vadd.f32 %v85, %v436
  %v438 = vpop.f32.mrb[0].mxu0
  %439 = vmatprep.mubr.f32.mxu0 0.0
  %440 = vmatmul.mubr.f32.gmra.mrb[0].mxu0 %v146
  %v441 = vpop.f32.mrb[0].mxu0
  %v442 = vadd.f32 %v85, %v441
  %v443 = vpop.f32.mrb[0].mxu0
  %444 = vmatprep.mubr.f32.mxu0 0.0
  %445 = vmatmul.mubr.f32.gmra.mrb[0].mxu0 %v149
  %v446 = vpop.f32.mrb[0].mxu0
  %v447 = vadd.f32 %v85, %v446
  %v448 = vpop.f32.mrb[0].mxu0
  %449 = vmatprep.mubr.f32.mxu0 0.0
  %450 = vmatmul.mubr.f32.gmra.mrb[0].mxu0 %v152
  %v451 = vpop.f32.mrb[0].mxu0
  %v452 = vadd.f32 %v85, %v451
  %v453 = vpop.f32.mrb[0].mxu0
  %454 = vmatprep.mubr.f32.mxu0 0.0
  %455 = vmatmul.mubr.f32.gmra.mrb[0].mxu0 %v155
  %v456 = vpop.f32.mrb[0].mxu0
  %v457 = vadd.f32 %v85, %v456
  %v458 = vpop.f32.mrb[0].mxu0
  %459 = vmatprep.mubr.f32.mxu0 0.0
  %460 = vmatmul.mubr.f32.gmra.mrb[0].mxu0 %v158
  %v461 = vpop.f32.mrb[0].mxu0
  %v462 = vadd.f32 %v85, %v461
  %v463 = vpop.f32.mrb[0].mxu0
  %464 = vmatprep.mubr.f32.mxu0 0.0
  %465 = vmatmul.mubr.f32.gmra.mrb[0].mxu0 %v161
  %v466 = vpop.f32.mrb[0].mxu0
  %v467 = vadd.f32 %v85, %v466
  %v468 = vpop.f32.mrb[0].mxu0
  %469 = vmatprep.mubr.f32.mxu0 0.0
  %470 = vmatmul.mubr.f32.gmra.mrb[0].mxu0 %v164
  %v471 = vpop.f32.mrb[0].mxu0
  %v472 = vadd.f32 %v85, %v471
  %v473 = vpop.f32.mrb[0].mxu0
  %474 = vmatprep.mubr.f32.mxu0 0.0
  %475 = vmatmul.mubr.f32.gmra.mrb[0].mxu0 %v167
  %v476 = vpop.f32.mrb[0].mxu0
  %v477 = vadd.f32 %v85, %v476
  %v478 = vpop.f32.mrb[0].mxu0
  %479 = vmatprep.mubr.f32.mxu0 0.0
  %480 = vmatmul.mubr.f32.gmra.mrb[0].mxu0 %v170
  %v481 = vpop.f32.mrb[0].mxu0
  %v482 = vadd.f32 %v85, %v481
  %v483 = vpop.f32.mrb[0].mxu0
  %484 = vmatprep.mubr.f32.mxu0 0.0
  %485 = vmatmul.mubr.f32.gmra.mrb[0].mxu0 %v173
  %v486 = vpop.f32.mrb[0].mxu0
  %v487 = vadd.f32 %v85, %v486
  %v488 = vpop.f32.mrb[0].mxu0
  %489 = vmatprep.mubr.f32.mxu0 0.0
  %490 = vmatmul.mubr.f32.gmra.mrb[0].mxu0 %v176
  %v491 = vpop.f32.mrb[0].mxu0
  %v492 = vadd.f32 %v85, %v491
  %v493 = vpop.f32.mrb[0].mxu0
  %494 = vmatprep.mubr.f32.mxu0 0.0
  %495 = vmatmul.mubr.f32.gmra.mrb[0].mxu0 %v179
  %v496 = vpop.f32.mrb[0].mxu0
  %v497 = vadd.f32 %v85, %v496
  %v498 = vpop.f32.mrb[0].mxu0
  %499 = vmatprep.mubr.f32.mxu0 0.0
  %500 = vmatmul.mubr.f32.gmra.mrb[0].mxu0 %v182
  %v501 = vpop.f32.mrb[0].mxu0
  %v502 = vadd.f32 %v85, %v501
  %v503 = vpop.f32.mrb[0].mxu0
  %504 = vmatprep.mubr.f32.mxu0 0.0
  %505 = vmatmul.mubr.f32.gmra.mrb[0].mxu0 %v185
  %v506 = vpop.f32.mrb[0].mxu0
  %v507 = vadd.f32 %v85, %v506
  %v508 = vpop.f32.mrb[0].mxu0
  %509 = vmatprep.mubr.f32.mxu0 0.0
  %510 = vmatmul.mubr.f32.gmra.mrb[0].mxu0 %v188
  %v511 = vpop.f32.mrb[0].mxu0
  %v512 = vadd.f32 %v85, %v511
  %v513 = vpop.f32.mrb[0].mxu0
  %514 = vmatprep.mubr.f32.mxu0 0.0
  %515 = vmatmul.mubr.f32.gmra.mrb[0].mxu0 %v191
  %v516 = vpop.f32.mrb[0].mxu0
  %v517 = vadd.f32 %v85, %v516
  %v518 = vpop.f32.mrb[0].mxu0
  %519 = vmatprep.mubr.f32.mxu0 0.0
  %520 = vmatmul.mubr.f32.gmra.mrb[0].mxu0 %v194
  %v521 = vpop.f32.mrb[0].mxu0
  %v522 = vadd.f32 %v85, %v521
  %v523 = vpop.f32.mrb[0].mxu0
  %524 = vmatprep.mubr.f32.mxu0 0.0
  %525 = vmatmul.mubr.f32.gmra.mrb[0].mxu0 %v197
  %v526 = vpop.f32.mrb[0].mxu0
  %v527 = vadd.f32 %v85, %v526
  %v528 = vpop.f32.mrb[0].mxu0
  %529 = vmatprep.mubr.f32.mxu0 0.0
  %530 = vmatmul.mubr.f32.gmra.mrb[0].mxu0 %v200
  %v531 = vpop.f32.mrb[0].mxu0
  %v532 = vadd.f32 %v85, %v531
  %v533 = vpop.f32.mrb[0].mxu0
  %534 = vmatprep.mubr.f32.mxu0 0.0
  %535 = vmatmul.mubr.f32.gmra.mrb[0].mxu0 %v203
  %v536 = vpop.f32.mrb[0].mxu0
  %v537 = vadd.f32 %v85, %v536
  %v538 = vpop.f32.mrb[0].mxu0
  %539 = vmatprep.mubr.f32.mxu0 0.0
  %540 = vmatmul.mubr.f32.gmra.mrb[0].mxu0 %v206
  %v541 = vpop.f32.mrb[0].mxu0
  %v542 = vadd.f32 %v85, %v541
  %v543 = vpop.f32.mrb[0].mxu0
  %544 = vmatprep.mubr.f32.mxu0 0.0
  %545 = vmatmul.mubr.f32.gmra.mrb[0].mxu0 %v209
  %v546 = vpop.f32.mrb[0].mxu0
  %v547 = vadd.f32 %v85, %v546
  %v548 = vpop.f32.mrb[0].mxu0
  %549 = vmatprep.mubr.f32.mxu0 0.0
  %550 = vmatmul.mubr.f32.gmra.mrb[0].mxu0 %v212
  %v551 = vpop.f32.mrb[0].mxu0
  %v552 = vadd.f32 %v85, %v551
  %v553 = vpop.f32.mrb[0].mxu0
  %554 = vmatprep.mubr.f32.mxu0 0.0
  %555 = vmatmul.mubr.f32.gmra.mrb[0].mxu0 %v215
  %v556 = vpop.f32.mrb[0].mxu0
  %v557 = vadd.f32 %v85, %v556
  %v558 = vpop.f32.mrb[0].mxu0
  %559 = vmatprep.mubr.f32.mxu0 0.0
  %560 = vmatmul.mubr.f32.gmra.mrb[0].mxu0 %v218
  %v561 = vpop.f32.mrb[0].mxu0
  %v562 = vadd.f32 %v85, %v561
  %v563 = vpop.f32.mrb[0].mxu0
  %564 = vmatprep.mubr.f32.mxu0 0.0
  %565 = vmatmul.mubr.f32.gmra.mrb[0].mxu0 %v221
  %v566 = vpop.f32.mrb[0].mxu0
  %v567 = vadd.f32 %v85, %v566
  %v568 = vpop.f32.mrb[0].mxu0
  %569 = vmatprep.mubr.f32.mxu0 0.0
  %570 = vmatmul.mubr.f32.gmra.mrb[0].mxu0 %v224
  %v571 = vpop.f32.mrb[0].mxu0
  %v572 = vadd.f32 %v85, %v571
  %v573 = vpop.f32.mrb[0].mxu0
  %574 = vmatprep.mubr.f32.mxu0 0.0
  %575 = vmatmul.mubr.f32.gmra.mrb[0].mxu0 %v227
  %v576 = vpop.f32.mrb[0].mxu0
  %v577 = vadd.f32 %v85, %v576
  %v578 = vpop.f32.mrb[0].mxu0
  %579 = vmatprep.mubr.f32.mxu0 0.0
  %580 = vmatmul.mubr.f32.gmra.mrb[0].mxu0 %v230
  %v581 = vpop.f32.mrb[0].mxu0
  %v582 = vadd.f32 %v85, %v581
  %v583 = vpop.f32.mrb[0].mxu0
  %584 = vmatprep.mubr.f32.mxu0 0.0
  %585 = vmatmul.mubr.f32.gmra.mrb[0].mxu0 %v233
  %v586 = vpop.f32.mrb[0].mxu0
  %v587 = vadd.f32 %v85, %v586
  %v588 = vpop.f32.mrb[0].mxu0
  %589 = vmatprep.mubr.f32.mxu0 0.0
  %590 = vmatmul.mubr.f32.gmra.mrb[0].mxu0 %v236
  %v591 = vpop.f32.mrb[0].mxu0
  %v592 = vadd.f32 %v85, %v591
  %v593 = vpop.f32.mrb[0].mxu0
  %594 = vmatprep.mubr.f32.mxu0 0.0
  %595 = vmatmul.mubr.f32.gmra.mrb[0].mxu0 %v239
  %v596 = vpop.f32.mrb[0].mxu0
  %v597 = vadd.f32 %v85, %v596
  %v598 = vpop.f32.mrb[0].mxu0
  %599 = vmatprep.mubr.f32.mxu0 0.0
  %600 = vmatmul.mubr.f32.gmra.mrb[0].mxu0 %v242
  %v601 = vpop.f32.mrb[0].mxu0
  %v602 = vadd.f32 %v85, %v601
  %v603 = vpop.f32.mrb[0].mxu0
  %604 = vmatprep.mubr.f32.mxu0 0.0
  %605 = vmatmul.mubr.f32.gmra.mrb[0].mxu0 %v245
  %v606 = vpop.f32.mrb[0].mxu0
  %v607 = vadd.f32 %v85, %v606
  %v608 = vpop.f32.mrb[0].mxu0
  %609 = vmatprep.mubr.f32.mxu0 0.0
  %610 = vmatmul.mubr.f32.gmra.mrb[0].mxu0 %v248
  %v611 = vpop.f32.mrb[0].mxu0
  %v612 = vadd.f32 %v85, %v611
  %v613 = vpop.f32.mrb[0].mxu0
  %614 = vmatprep.mubr.f32.mxu0 0.0
  %615 = vmatmul.mubr.f32.gmra.mrb[0].mxu0 %v251
  %v616 = vpop.f32.mrb[0].mxu0
  %v617 = vadd.f32 %v85, %v616
  %v618 = vpop.f32.mrb[0].mxu0
  %619 = vmatprep.mubr.f32.mxu0 0.0
  %620 = vmatmul.mubr.f32.gmra.mrb[0].mxu0 %v254
  %v621 = vpop.f32.mrb[0].mxu0
  %v622 = vadd.f32 %v85, %v621
  %v623 = vpop.f32.mrb[0].mxu0
  %624 = vmatprep.mubr.f32.mxu0 0.0
  %625 = vmatmul.mubr.f32.gmra.mrb[0].mxu0 %v257
  %v626 = vpop.f32.mrb[0].mxu0
  %v627 = vadd.f32 %v85, %v626
  %v628 = vpop.f32.mrb[0].mxu0
  %629 = vmatprep.mubr.f32.mxu0 0.0
  %630 = vmatmul.mubr.f32.gmra.mrb[0].mxu0 %v260
  %v631 = vpop.f32.mrb[0].mxu0
  %v632 = vadd.f32 %v85, %v631
  %v633 = vpop.f32.mrb[0].mxu0
  %634 = vmatprep.mubr.f32.mxu0 0.0
  %635 = vmatmul.mubr.f32.gmra.mrb[0].mxu0 %v263
  %v636 = vpop.f32.mrb[0].mxu0
  %v637 = vadd.f32 %v85, %v636
  %v638 = vpop.f32.mrb[0].mxu0
  %639 = vmatprep.mubr.f32.mxu0 0.0
  %640 = vmatmul.mubr.f32.gmra.mrb[0].mxu0 %v266
  %v641 = vpop.f32.mrb[0].mxu0
  %v642 = vadd.f32 %v85, %v641
  %v643 = vpop.f32.mrb[0].mxu0
  %644 = vmatprep.mubr.f32.mxu0 0.0
  %645 = vmatmul.mubr.f32.gmra.mrb[0].mxu0 %v269
  %v646 = vpop.f32.mrb[0].mxu0
  %v647 = vadd.f32 %v85, %v646
  %v648 = vpop.f32.mrb[0].mxu0
  %649 = vmatprep.mubr.f32.mxu0 0.0
  %650 = vmatmul.mubr.f32.gmra.mrb[0].mxu0 %v272
  %v651 = vpop.f32.mrb[0].mxu0
  %v652 = vadd.f32 %v85, %v651
  %v653 = vpop.f32.mrb[0].mxu0
  %654 = vmatprep.mubr.f32.mxu0 0.0
  %655 = vmatmul.mubr.f32.gmra.mrb[0].mxu0 %v275
  %v656 = vpop.f32.mrb[0].mxu0
  %v657 = vadd.f32 %v85, %v656
  %v658 = vpop.f32.mrb[0].mxu0
  %659 = vmatprep.mubr.f32.mxu0 0.0
  %660 = vmatmul.mubr.f32.gmra.mrb[0].mxu0 %v278
  %v661 = vpop.f32.mrb[0].mxu0
  %v662 = vadd.f32 %v85, %v661
  %v663 = vpop.f32.mrb[0].mxu0
  %664 = vdwg.mxu0
  %v665 = vmax.f32 %v347, 0.0
  %v666 = vmax.f32 %v352, 0.0
  %v667 = vmax.f32 %v357, 0.0
  %v668 = vmax.f32 %v362, 0.0
  %v669 = vmax.f32 %v367, 0.0
  %v670 = vmax.f32 %v372, 0.0
  %v671 = vmax.f32 %v377, 0.0
  %v672 = vmax.f32 %v382, 0.0
  %v673 = vmax.f32 %v387, 0.0
  %v674 = vmax.f32 %v392, 0.0
  %v675 = vmax.f32 %v397, 0.0
  %v676 = vmax.f32 %v402, 0.0
  %v677 = vmax.f32 %v407, 0.0
  %v678 = vmax.f32 %v412, 0.0
  %v679 = vmax.f32 %v417, 0.0
  %v680 = vmax.f32 %v422, 0.0
  %v681 = vmax.f32 %v427, 0.0
  %v682 = vmax.f32 %v432, 0.0
  %v683 = vmax.f32 %v437, 0.0
  %v684 = vmax.f32 %v442, 0.0
  %v685 = vmax.f32 %v447, 0.0
  %v686 = vmax.f32 %v452, 0.0
  %v687 = vmax.f32 %v457, 0.0
  %v688 = vmax.f32 %v462, 0.0
  %v689 = vmax.f32 %v467, 0.0
  %v690 = vmax.f32 %v472, 0.0
  %v691 = vmax.f32 %v477, 0.0
  %v692 = vmax.f32 %v482, 0.0
  %v693 = vmax.f32 %v487, 0.0
  %v694 = vmax.f32 %v492, 0.0
  %v695 = vmax.f32 %v497, 0.0
  %v696 = vmax.f32 %v502, 0.0
  %v697 = vmax.f32 %v507, 0.0
  %v698 = vmax.f32 %v512, 0.0
  %v699 = vmax.f32 %v517, 0.0
  %v700 = vmax.f32 %v522, 0.0
  %v701 = vmax.f32 %v527, 0.0
  %v702 = vmax.f32 %v532, 0.0
  %v703 = vmax.f32 %v537, 0.0
  %v704 = vmax.f32 %v542, 0.0
  %v705 = vmax.f32 %v547, 0.0
  %v706 = vmax.f32 %v552, 0.0
  %v707 = vmax.f32 %v557, 0.0
  %v708 = vmax.f32 %v562, 0.0
  %v709 = vmax.f32 %v567, 0.0
  %v710 = vmax.f32 %v572, 0.0
  %v711 = vmax.f32 %v577, 0.0
  %v712 = vmax.f32 %v582, 0.0
  %v713 = vmax.f32 %v587, 0.0
  %v714 = vmax.f32 %v592, 0.0
  %v715 = vmax.f32 %v597, 0.0
  %v716 = vmax.f32 %v602, 0.0
  %v717 = vmax.f32 %v607, 0.0
  %v718 = vmax.f32 %v612, 0.0
  %v719 = vmax.f32 %v617, 0.0
  %v720 = vmax.f32 %v622, 0.0
  %v721 = vmax.f32 %v627, 0.0
  %v722 = vmax.f32 %v632, 0.0
  %v723 = vmax.f32 %v637, 0.0
  %v724 = vmax.f32 %v642, 0.0
  %v725 = vmax.f32 %v647, 0.0
  %v726 = vmax.f32 %v652, 0.0
  %v727 = vmax.f32 %v657, 0.0
  %v728 = vmax.f32 %v662, 0.0
  %vm729 = vcmask 261120
  %730 = vst.msk [vmem:[%s3] sm:$0xff] %vm729, %v665
  %731 = vst.msk [vmem:[%s3 + $0x8] sm:$0xff] %vm729, %v666
  %732 = vst.msk [vmem:[%s3 + $0x10] sm:$0xff] %vm729, %v667
  %733 = vst.msk [vmem:[%s3 + $0x18] sm:$0xff] %vm729, %v668
  %734 = vst.msk [vmem:[%s3 + $0x20] sm:$0xff] %vm729, %v669
  %735 = vst.msk [vmem:[%s3 + $0x28] sm:$0xff] %vm729, %v670
  %736 = vst.msk [vmem:[%s3 + $0x30] sm:$0xff] %vm729, %v671
  %737 = vst.msk [vmem:[%s3 + $0x38] sm:$0xff] %vm729, %v672
  %738 = vst.msk [vmem:[%s3 + $0x40] sm:$0xff] %vm729, %v673
  %739 = vst.msk [vmem:[%s3 + $0x48] sm:$0xff] %vm729, %v674
  %740 = vst.msk [vmem:[%s3 + $0x50] sm:$0xff] %vm729, %v675
  %741 = vst.msk [vmem:[%s3 + $0x58] sm:$0xff] %vm729, %v676
  %742 = vst.msk [vmem:[%s3 + $0x60] sm:$0xff] %vm729, %v677
  %743 = vst.msk [vmem:[%s3 + $0x68] sm:$0xff] %vm729, %v678
  %744 = vst.msk [vmem:[%s3 + $0x70] sm:$0xff] %vm729, %v679
  %745 = vst.msk [vmem:[%s3 + $0x78] sm:$0xff] %vm729, %v680
  %746 = vst.msk [vmem:[%s3 + $0x80] sm:$0xff] %vm729, %v681
  %747 = vst.msk [vmem:[%s3 + $0x88] sm:$0xff] %vm729, %v682
  %748 = vst.msk [vmem:[%s3 + $0x90] sm:$0xff] %vm729, %v683
  %749 = vst.msk [vmem:[%s3 + $0x98] sm:$0xff] %vm729, %v684
  %750 = vst.msk [vmem:[%s3 + $0xa0] sm:$0xff] %vm729, %v685
  %751 = vst.msk [vmem:[%s3 + $0xa8] sm:$0xff] %vm729, %v686
  %752 = vst.msk [vmem:[%s3 + $0xb0] sm:$0xff] %vm729, %v687
  %753 = vst.msk [vmem:[%s3 + $0xb8] sm:$0xff] %vm729, %v688
  %754 = vst.msk [vmem:[%s3 + $0xc0] sm:$0xff] %vm729, %v689
  %755 = vst.msk [vmem:[%s3 + $0xc8] sm:$0xff] %vm729, %v690
  %756 = vst.msk [vmem:[%s3 + $0xd0] sm:$0xff] %vm729, %v691
  %757 = vst.msk [vmem:[%s3 + $0xd8] sm:$0xff] %vm729, %v692
  %758 = vst.msk [vmem:[%s3 + $0xe0] sm:$0xff] %vm729, %v693
  %759 = vst.msk [vmem:[%s3 + $0xe8] sm:$0xff] %vm729, %v694
  %760 = vst.msk [vmem:[%s3 + $0xf0] sm:$0xff] %vm729, %v695
  %761 = vst.msk [vmem:[%s3 + $0xf8] sm:$0xff] %vm729, %v696
  %762 = vst.msk [vmem:[%s3 + $0x100] sm:$0xff] %vm729, %v697
  %763 = vst.msk [vmem:[%s3 + $0x108] sm:$0xff] %vm729, %v698
  %764 = vst.msk [vmem:[%s3 + $0x110] sm:$0xff] %vm729, %v699
  %765 = vst.msk [vmem:[%s3 + $0x118] sm:$0xff] %vm729, %v700
  %766 = vst.msk [vmem:[%s3 + $0x120] sm:$0xff] %vm729, %v701
  %767 = vst.msk [vmem:[%s3 + $0x128] sm:$0xff] %vm729, %v702
  %768 = vst.msk [vmem:[%s3 + $0x130] sm:$0xff] %vm729, %v703
  %769 = vst.msk [vmem:[%s3 + $0x138] sm:$0xff] %vm729, %v704
  %770 = vst.msk [vmem:[%s3 + $0x140] sm:$0xff] %vm729, %v705
  %771 = vst.msk [vmem:[%s3 + $0x148] sm:$0xff] %vm729, %v706
  %772 = vst.msk [vmem:[%s3 + $0x150] sm:$0xff] %vm729, %v707
  %773 = vst.msk [vmem:[%s3 + $0x158] sm:$0xff] %vm729, %v708
  %774 = vst.msk [vmem:[%s3 + $0x160] sm:$0xff] %vm729, %v709
  %775 = vst.msk [vmem:[%s3 + $0x168] sm:$0xff] %vm729, %v710
  %776 = vst.msk [vmem:[%s3 + $0x170] sm:$0xff] %vm729, %v711
  %777 = vst.msk [vmem:[%s3 + $0x178] sm:$0xff] %vm729, %v712
  %778 = vst.msk [vmem:[%s3 + $0x180] sm:$0xff] %vm729, %v713
  %779 = vst.msk [vmem:[%s3 + $0x188] sm:$0xff] %vm729, %v714
  %780 = vst.msk [vmem:[%s3 + $0x190] sm:$0xff] %vm729, %v715
  %781 = vst.msk [vmem:[%s3 + $0x198] sm:$0xff] %vm729, %v716
  %782 = vst.msk [vmem:[%s3 + $0x1a0] sm:$0xff] %vm729, %v717
  %783 = vst.msk [vmem:[%s3 + $0x1a8] sm:$0xff] %vm729, %v718
  %784 = vst.msk [vmem:[%s3 + $0x1b0] sm:$0xff] %vm729, %v719
  %785 = vst.msk [vmem:[%s3 + $0x1b8] sm:$0xff] %vm729, %v720
  %786 = vst.msk [vmem:[%s3 + $0x1c0] sm:$0xff] %vm729, %v721
  %787 = vst.msk [vmem:[%s3 + $0x1c8] sm:$0xff] %vm729, %v722
  %788 = vst.msk [vmem:[%s3 + $0x1d0] sm:$0xff] %vm729, %v723
  %789 = vst.msk [vmem:[%s3 + $0x1d8] sm:$0xff] %vm729, %v724
  %790 = vst.msk [vmem:[%s3 + $0x1e0] sm:$0xff] %vm729, %v725
  %791 = vst.msk [vmem:[%s3 + $0x1e8] sm:$0xff] %vm729, %v726
  %792 = vst.msk [vmem:[%s3 + $0x1f0] sm:$0xff] %vm729, %v727
  %793 = vst.msk [vmem:[%s3 + $0x1f8] sm:$0xff] %vm729, %v728
  // Predicated region
  $region14: #{encoder_forward.4} parent=0 // pred_check
    _
  $region15: #{encoder_forward.4} parent=0 // pred_check_branch
    %795 = sbr.rel (0) target = $region17
  $region16: #{encoder_forward.4} parent=0 // pred_region
    _
  $region17: #{encoder_forward.4} parent=0 // pred_fallthru
    _
  // Predicated region
  $region18: #{encoder_forward.4} parent=0 // pred_check
    _
  $region19: #{encoder_forward.4} parent=0 // pred_check_branch
    %797 = sbr.rel (0) target = $region21
  $region20: #{encoder_forward.4} parent=0 // pred_region
    _
  $region21: #{encoder_forward.4} parent=0 // pred_fallthru
    _

// kernel: encoder_forward.5
$region0: #{encoder_forward.5}
  #allocation0 [shape = 'u32[]', space=smem, size = 0x4, offset = 0x4, fixed_abs, tag = 'smem constant byte address 0x4 - core index']
  #allocation1 [shape = 'u32[144,128]{1,0:T(1,128)}', space=vmem, size = 0x12000, scoped, tag = 'internal scratch']
  %s0 = inlined_call_operand.vmem [shape: f32[128,512], index: 0, kind: input, shape index: {}]
  %s1 = inlined_call_operand.vmem [shape: f32[512,32], index: 1, kind: input, shape index: {}]
  %s2 = inlined_call_operand.vmem [shape: f32[1,32], index: 2, kind: input, shape index: {}]
  %s3 = inlined_call_operand.vmem [shape: f32[128,32], index: 3, kind: output, shape index: {}]
  %s4 = sld [smem:[#allocation0]]
  $region22: #{encoder_forward.5} parent=0
    _
  %s6 = ssub.s32 1, %s4
  %s7 = scalar_select 0, %s6, %s4
  // Predicated region
  $region2: #{encoder_forward.5} parent=0 // pred_check
    _
  $region3: #{encoder_forward.5} parent=0 // pred_check_branch
    %9 = sbr.rel (0) target = $region5
  $region4: #{encoder_forward.5} parent=0 // pred_region
    _
  $region5: #{encoder_forward.5} parent=0 // pred_fallthru
    _
  // Predicated region
  $region6: #{encoder_forward.5} parent=0 // pred_check
    _
  $region7: #{encoder_forward.5} parent=0 // pred_check_branch
    %11 = sbr.rel (0) target = $region9
  $region8: #{encoder_forward.5} parent=0 // pred_region
    _
  $region9: #{encoder_forward.5} parent=0 // pred_fallthru
    _
  // Predicated region
  $region10: #{encoder_forward.5} parent=0 // pred_check
    _
  $region11: #{encoder_forward.5} parent=0 // pred_check_branch
    %13 = sbr.rel (0) target = $region13
  $region12: #{encoder_forward.5} parent=0 // pred_region
    _
  $region13: #{encoder_forward.5} parent=0 // pred_fallthru
    _
  %v14 = vld [vmem:[%s0] sm:$0xff]
  %v15 = vld [vmem:[%s0 + $0x8] sm:$0xff]
  %v16 = vld [vmem:[%s0 + $0x10] sm:$0xff]
  %v17 = vld [vmem:[%s0 + $0x18] sm:$0xff]
  %v18 = vld [vmem:[%s0 + $0x20] sm:$0xff]
  %v19 = vld [vmem:[%s0 + $0x28] sm:$0xff]
  %v20 = vld [vmem:[%s0 + $0x30] sm:$0xff]
  %v21 = vld [vmem:[%s0 + $0x38] sm:$0xff]
  %v22 = vld [vmem:[%s0 + $0x40] sm:$0xff]
  %v23 = vld [vmem:[%s0 + $0x48] sm:$0xff]
  %v24 = vld [vmem:[%s0 + $0x50] sm:$0xff]
  %v25 = vld [vmem:[%s0 + $0x58] sm:$0xff]
  %v26 = vld [vmem:[%s0 + $0x60] sm:$0xff]
  %v27 = vld [vmem:[%s0 + $0x68] sm:$0xff]
  %v28 = vld [vmem:[%s0 + $0x70] sm:$0xff]
  %v29 = vld [vmem:[%s0 + $0x78] sm:$0xff]
  %v30 = vld [vmem:[%s0 + $0x80] sm:$0xff]
  %v31 = vld [vmem:[%s0 + $0x88] sm:$0xff]
  %v32 = vld [vmem:[%s0 + $0x90] sm:$0xff]
  %v33 = vld [vmem:[%s0 + $0x98] sm:$0xff]
  %v34 = vld [vmem:[%s0 + $0xa0] sm:$0xff]
  %v35 = vld [vmem:[%s0 + $0xa8] sm:$0xff]
  %v36 = vld [vmem:[%s0 + $0xb0] sm:$0xff]
  %v37 = vld [vmem:[%s0 + $0xb8] sm:$0xff]
  %v38 = vld [vmem:[%s0 + $0xc0] sm:$0xff]
  %v39 = vld [vmem:[%s0 + $0xc8] sm:$0xff]
  %v40 = vld [vmem:[%s0 + $0xd0] sm:$0xff]
  %v41 = vld [vmem:[%s0 + $0xd8] sm:$0xff]
  %v42 = vld [vmem:[%s0 + $0xe0] sm:$0xff]
  %v43 = vld [vmem:[%s0 + $0xe8] sm:$0xff]
  %v44 = vld [vmem:[%s0 + $0xf0] sm:$0xff]
  %v45 = vld [vmem:[%s0 + $0xf8] sm:$0xff]
  %v46 = vld [vmem:[%s0 + $0x100] sm:$0xff]
  %v47 = vld [vmem:[%s0 + $0x108] sm:$0xff]
  %v48 = vld [vmem:[%s0 + $0x110] sm:$0xff]
  %v49 = vld [vmem:[%s0 + $0x118] sm:$0xff]
  %v50 = vld [vmem:[%s0 + $0x120] sm:$0xff]
  %v51 = vld [vmem:[%s0 + $0x128] sm:$0xff]
  %v52 = vld [vmem:[%s0 + $0x130] sm:$0xff]
  %v53 = vld [vmem:[%s0 + $0x138] sm:$0xff]
  %v54 = vld [vmem:[%s0 + $0x140] sm:$0xff]
  %v55 = vld [vmem:[%s0 + $0x148] sm:$0xff]
  %v56 = vld [vmem:[%s0 + $0x150] sm:$0xff]
  %v57 = vld [vmem:[%s0 + $0x158] sm:$0xff]
  %v58 = vld [vmem:[%s0 + $0x160] sm:$0xff]
  %v59 = vld [vmem:[%s0 + $0x168] sm:$0xff]
  %v60 = vld [vmem:[%s0 + $0x170] sm:$0xff]
  %v61 = vld [vmem:[%s0 + $0x178] sm:$0xff]
  %v62 = vld [vmem:[%s0 + $0x180] sm:$0xff]
  %v63 = vld [vmem:[%s0 + $0x188] sm:$0xff]
  %v64 = vld [vmem:[%s0 + $0x190] sm:$0xff]
  %v65 = vld [vmem:[%s0 + $0x198] sm:$0xff]
  %v66 = vld [vmem:[%s0 + $0x1a0] sm:$0xff]
  %v67 = vld [vmem:[%s0 + $0x1a8] sm:$0xff]
  %v68 = vld [vmem:[%s0 + $0x1b0] sm:$0xff]
  %v69 = vld [vmem:[%s0 + $0x1b8] sm:$0xff]
  %v70 = vld [vmem:[%s0 + $0x1c0] sm:$0xff]
  %v71 = vld [vmem:[%s0 + $0x1c8] sm:$0xff]
  %v72 = vld [vmem:[%s0 + $0x1d0] sm:$0xff]
  %v73 = vld [vmem:[%s0 + $0x1d8] sm:$0xff]
  %v74 = vld [vmem:[%s0 + $0x1e0] sm:$0xff]
  %v75 = vld [vmem:[%s0 + $0x1e8] sm:$0xff]
  %v76 = vld [vmem:[%s0 + $0x1f0] sm:$0xff]
  %v77 = vld [vmem:[%s0 + $0x1f8] sm:$0xff]
  %v78 = vld [vmem:[%s1] sm:$0xff]
  %v79 = vld [vmem:[%s1 + $0x8] sm:$0xff]
  %v80 = vld [vmem:[%s1 + $0x10] sm:$0xff]
  %v81 = vld [vmem:[%s1 + $0x18] sm:$0xff]
  %v82 = vld [vmem:[%s1 + $0x20] sm:$0xff]
  %v83 = vld [vmem:[%s1 + $0x28] sm:$0xff]
  %v84 = vld [vmem:[%s1 + $0x30] sm:$0xff]
  %v85 = vld [vmem:[%s1 + $0x38] sm:$0xff]
  %v86 = vld [vmem:[%s1 + $0x40] sm:$0xff]
  %v87 = vld [vmem:[%s1 + $0x48] sm:$0xff]
  %v88 = vld [vmem:[%s1 + $0x50] sm:$0xff]
  %v89 = vld [vmem:[%s1 + $0x58] sm:$0xff]
  %v90 = vld [vmem:[%s1 + $0x60] sm:$0xff]
  %v91 = vld [vmem:[%s1 + $0x68] sm:$0xff]
  %v92 = vld [vmem:[%s1 + $0x70] sm:$0xff]
  %v93 = vld [vmem:[%s1 + $0x78] sm:$0xff]
  %v94 = vld [vmem:[%s1 + $0x80] sm:$0xff]
  %v95 = vld [vmem:[%s1 + $0x88] sm:$0xff]
  %v96 = vld [vmem:[%s1 + $0x90] sm:$0xff]
  %v97 = vld [vmem:[%s1 + $0x98] sm:$0xff]
  %v98 = vld [vmem:[%s1 + $0xa0] sm:$0xff]
  %v99 = vld [vmem:[%s1 + $0xa8] sm:$0xff]
  %v100 = vld [vmem:[%s1 + $0xb0] sm:$0xff]
  %v101 = vld [vmem:[%s1 + $0xb8] sm:$0xff]
  %v102 = vld [vmem:[%s1 + $0xc0] sm:$0xff]
  %v103 = vld [vmem:[%s1 + $0xc8] sm:$0xff]
  %v104 = vld [vmem:[%s1 + $0xd0] sm:$0xff]
  %v105 = vld [vmem:[%s1 + $0xd8] sm:$0xff]
  %v106 = vld [vmem:[%s1 + $0xe0] sm:$0xff]
  %v107 = vld [vmem:[%s1 + $0xe8] sm:$0xff]
  %v108 = vld [vmem:[%s1 + $0xf0] sm:$0xff]
  %v109 = vld [vmem:[%s1 + $0xf8] sm:$0xff]
  %v110 = vld [vmem:[%s1 + $0x100] sm:$0xff]
  %v111 = vld [vmem:[%s1 + $0x108] sm:$0xff]
  %v112 = vld [vmem:[%s1 + $0x110] sm:$0xff]
  %v113 = vld [vmem:[%s1 + $0x118] sm:$0xff]
  %v114 = vld [vmem:[%s1 + $0x120] sm:$0xff]
  %v115 = vld [vmem:[%s1 + $0x128] sm:$0xff]
  %v116 = vld [vmem:[%s1 + $0x130] sm:$0xff]
  %v117 = vld [vmem:[%s1 + $0x138] sm:$0xff]
  %v118 = vld [vmem:[%s1 + $0x140] sm:$0xff]
  %v119 = vld [vmem:[%s1 + $0x148] sm:$0xff]
  %v120 = vld [vmem:[%s1 + $0x150] sm:$0xff]
  %v121 = vld [vmem:[%s1 + $0x158] sm:$0xff]
  %v122 = vld [vmem:[%s1 + $0x160] sm:$0xff]
  %v123 = vld [vmem:[%s1 + $0x168] sm:$0xff]
  %v124 = vld [vmem:[%s1 + $0x170] sm:$0xff]
  %v125 = vld [vmem:[%s1 + $0x178] sm:$0xff]
  %v126 = vld [vmem:[%s1 + $0x180] sm:$0xff]
  %v127 = vld [vmem:[%s1 + $0x188] sm:$0xff]
  %v128 = vld [vmem:[%s1 + $0x190] sm:$0xff]
  %v129 = vld [vmem:[%s1 + $0x198] sm:$0xff]
  %v130 = vld [vmem:[%s1 + $0x1a0] sm:$0xff]
  %v131 = vld [vmem:[%s1 + $0x1a8] sm:$0xff]
  %v132 = vld [vmem:[%s1 + $0x1b0] sm:$0xff]
  %v133 = vld [vmem:[%s1 + $0x1b8] sm:$0xff]
  %v134 = vld [vmem:[%s1 + $0x1c0] sm:$0xff]
  %v135 = vld [vmem:[%s1 + $0x1c8] sm:$0xff]
  %v136 = vld [vmem:[%s1 + $0x1d0] sm:$0xff]
  %v137 = vld [vmem:[%s1 + $0x1d8] sm:$0xff]
  %v138 = vld [vmem:[%s1 + $0x1e0] sm:$0xff]
  %v139 = vld [vmem:[%s1 + $0x1e8] sm:$0xff]
  %v140 = vld [vmem:[%s1 + $0x1f0] sm:$0xff]
  %v141 = vld [vmem:[%s1 + $0x1f8] sm:$0xff]
  %v142 = vld [vmem:[%s2] sm:$0x1]
  %v144 = vlaneseq
  %v145 = vshrl.u32 %v144, 7
  %v146 = vsub.s32 0, %v145
  %v147 = vrot.slane %v142, %v146
  %149 = vmatprep.subr.mxu0 0.0
  %150 = vmatpush1.msra.mxu0 %v78
  %151 = vmatprep.subr.mxu0 0.0
  %152 = vmatpush1.msra.mxu0 %v79
  %153 = vmatprep.subr.mxu0 0.0
  %154 = vmatpush1.msra.mxu0 %v80
  %155 = vmatprep.subr.mxu0 0.0
  %156 = vmatpush1.msra.mxu0 %v81
  %157 = vmatprep.subr.mxu0 0.0
  %158 = vmatpush1.msra.mxu0 %v82
  %159 = vmatprep.subr.mxu0 0.0
  %160 = vmatpush1.msra.mxu0 %v83
  %161 = vmatprep.subr.mxu0 0.0
  %162 = vmatpush1.msra.mxu0 %v84
  %163 = vmatprep.subr.mxu0 0.0
  %164 = vmatpush1.msra.mxu0 %v85
  %165 = vmatprep.subr.mxu0 0.0
  %166 = vmatpush1.msra.mxu0 %v86
  %167 = vmatprep.subr.mxu0 0.0
  %168 = vmatpush1.msra.mxu0 %v87
  %169 = vmatprep.subr.mxu0 0.0
  %170 = vmatpush1.msra.mxu0 %v88
  %171 = vmatprep.subr.mxu0 0.0
  %172 = vmatpush1.msra.mxu0 %v89
  %173 = vmatprep.subr.mxu0 0.0
  %174 = vmatpush1.msra.mxu0 %v90
  %175 = vmatprep.subr.mxu0 0.0
  %176 = vmatpush1.msra.mxu0 %v91
  %177 = vmatprep.subr.mxu0 0.0
  %178 = vmatpush1.msra.mxu0 %v92
  %179 = vmatprep.subr.mxu0 0.0
  %180 = vmatpush1.msra.mxu0 %v93
  %181 = vmatprep.subr.mxu0 0.0
  %182 = vmatpush1.msra.mxu0 %v94
  %183 = vmatprep.subr.mxu0 0.0
  %184 = vmatpush1.msra.mxu0 %v95
  %185 = vmatprep.subr.mxu0 0.0
  %186 = vmatpush1.msra.mxu0 %v96
  %187 = vmatprep.subr.mxu0 0.0
  %188 = vmatpush1.msra.mxu0 %v97
  %189 = vmatprep.subr.mxu0 0.0
  %190 = vmatpush1.msra.mxu0 %v98
  %191 = vmatprep.subr.mxu0 0.0
  %192 = vmatpush1.msra.mxu0 %v99
  %193 = vmatprep.subr.mxu0 0.0
  %194 = vmatpush1.msra.mxu0 %v100
  %195 = vmatprep.subr.mxu0 0.0
  %196 = vmatpush1.msra.mxu0 %v101
  %197 = vmatprep.subr.mxu0 0.0
  %198 = vmatpush1.msra.mxu0 %v102
  %199 = vmatprep.subr.mxu0 0.0
  %200 = vmatpush1.msra.mxu0 %v103
  %201 = vmatprep.subr.mxu0 0.0
  %202 = vmatpush1.msra.mxu0 %v104
  %203 = vmatprep.subr.mxu0 0.0
  %204 = vmatpush1.msra.mxu0 %v105
  %205 = vmatprep.subr.mxu0 0.0
  %206 = vmatpush1.msra.mxu0 %v106
  %207 = vmatprep.subr.mxu0 0.0
  %208 = vmatpush1.msra.mxu0 %v107
  %209 = vmatprep.subr.mxu0 0.0
  %210 = vmatpush1.msra.mxu0 %v108
  %211 = vmatprep.subr.mxu0 0.0
  %212 = vmatpush1.msra.mxu0 %v109
  %213 = vmatprep.mubr.f32.mxu0 %v15
  %214 = vmatmul.mubr.f32.gmra.mrb[0].mxu0 %v14
  %v215 = vpop.f32.mrb[0].mxu0
  %v216 = vadd.f32 %v147, %v215
  %v217 = vpop.f32.mrb[0].mxu0
  %218 = vmatprep.mubr.f32.mxu0 %v19
  %219 = vmatmul.mubr.f32.gmra.mrb[0].mxu0 %v18
  %v220 = vpop.f32.mrb[0].mxu0
  %v221 = vadd.f32 %v147, %v220
  %v222 = vpop.f32.mrb[0].mxu0
  %223 = vmatprep.mubr.f32.mxu0 %v23
  %224 = vmatmul.mubr.f32.gmra.mrb[0].mxu0 %v22
  %v225 = vpop.f32.mrb[0].mxu0
  %v226 = vadd.f32 %v147, %v225
  %v227 = vpop.f32.mrb[0].mxu0
  %228 = vmatprep.mubr.f32.mxu0 %v27
  %229 = vmatmul.mubr.f32.gmra.mrb[0].mxu0 %v26
  %v230 = vpop.f32.mrb[0].mxu0
  %v231 = vadd.f32 %v147, %v230
  %v232 = vpop.f32.mrb[0].mxu0
  %233 = vmatprep.mubr.f32.mxu0 %v31
  %234 = vmatmul.mubr.f32.gmra.mrb[0].mxu0 %v30
  %v235 = vpop.f32.mrb[0].mxu0
  %v236 = vadd.f32 %v147, %v235
  %v237 = vpop.f32.mrb[0].mxu0
  %238 = vmatprep.mubr.f32.mxu0 %v35
  %239 = vmatmul.mubr.f32.gmra.mrb[0].mxu0 %v34
  %v240 = vpop.f32.mrb[0].mxu0
  %v241 = vadd.f32 %v147, %v240
  %v242 = vpop.f32.mrb[0].mxu0
  %243 = vmatprep.mubr.f32.mxu0 %v39
  %244 = vmatmul.mubr.f32.gmra.mrb[0].mxu0 %v38
  %v245 = vpop.f32.mrb[0].mxu0
  %v246 = vadd.f32 %v147, %v245
  %v247 = vpop.f32.mrb[0].mxu0
  %248 = vmatprep.mubr.f32.mxu0 %v43
  %249 = vmatmul.mubr.f32.gmra.mrb[0].mxu0 %v42
  %v250 = vpop.f32.mrb[0].mxu0
  %v251 = vadd.f32 %v147, %v250
  %v252 = vpop.f32.mrb[0].mxu0
  %253 = vmatprep.mubr.f32.mxu0 %v47
  %254 = vmatmul.mubr.f32.gmra.mrb[0].mxu0 %v46
  %v255 = vpop.f32.mrb[0].mxu0
  %v256 = vadd.f32 %v147, %v255
  %v257 = vpop.f32.mrb[0].mxu0
  %258 = vmatprep.mubr.f32.mxu0 %v51
  %259 = vmatmul.mubr.f32.gmra.mrb[0].mxu0 %v50
  %v260 = vpop.f32.mrb[0].mxu0
  %v261 = vadd.f32 %v147, %v260
  %v262 = vpop.f32.mrb[0].mxu0
  %263 = vmatprep.mubr.f32.mxu0 %v55
  %264 = vmatmul.mubr.f32.gmra.mrb[0].mxu0 %v54
  %v265 = vpop.f32.mrb[0].mxu0
  %v266 = vadd.f32 %v147, %v265
  %v267 = vpop.f32.mrb[0].mxu0
  %268 = vmatprep.mubr.f32.mxu0 %v59
  %269 = vmatmul.mubr.f32.gmra.mrb[0].mxu0 %v58
  %v270 = vpop.f32.mrb[0].mxu0
  %v271 = vadd.f32 %v147, %v270
  %v272 = vpop.f32.mrb[0].mxu0
  %273 = vmatprep.mubr.f32.mxu0 %v63
  %274 = vmatmul.mubr.f32.gmra.mrb[0].mxu0 %v62
  %v275 = vpop.f32.mrb[0].mxu0
  %v276 = vadd.f32 %v147, %v275
  %v277 = vpop.f32.mrb[0].mxu0
  %278 = vmatprep.mubr.f32.mxu0 %v67
  %279 = vmatmul.mubr.f32.gmra.mrb[0].mxu0 %v66
  %v280 = vpop.f32.mrb[0].mxu0
  %v281 = vadd.f32 %v147, %v280
  %v282 = vpop.f32.mrb[0].mxu0
  %283 = vmatprep.mubr.f32.mxu0 %v71
  %284 = vmatmul.mubr.f32.gmra.mrb[0].mxu0 %v70
  %v285 = vpop.f32.mrb[0].mxu0
  %v286 = vadd.f32 %v147, %v285
  %v287 = vpop.f32.mrb[0].mxu0
  %288 = vmatprep.mubr.f32.mxu0 %v75
  %289 = vmatmul.mubr.f32.gmra.mrb[0].mxu0 %v74
  %v290 = vpop.f32.mrb[0].mxu0
  %v291 = vadd.f32 %v147, %v290
  %v292 = vpop.f32.mrb[0].mxu0
  %293 = vdwg.mxu0
  %294 = vmatprep.subr.mxu0 0.0
  %295 = vmatpush1.msra.mxu0 %v110
  %296 = vmatprep.subr.mxu0 0.0
  %297 = vmatpush1.msra.mxu0 %v111
  %298 = vmatprep.subr.mxu0 0.0
  %299 = vmatpush1.msra.mxu0 %v112
  %300 = vmatprep.subr.mxu0 0.0
  %301 = vmatpush1.msra.mxu0 %v113
  %302 = vmatprep.subr.mxu0 0.0
  %303 = vmatpush1.msra.mxu0 %v114
  %304 = vmatprep.subr.mxu0 0.0
  %305 = vmatpush1.msra.mxu0 %v115
  %306 = vmatprep.subr.mxu0 0.0
  %307 = vmatpush1.msra.mxu0 %v116
  %308 = vmatprep.subr.mxu0 0.0
  %309 = vmatpush1.msra.mxu0 %v117
  %310 = vmatprep.subr.mxu0 0.0
  %311 = vmatpush1.msra.mxu0 %v118
  %312 = vmatprep.subr.mxu0 0.0
  %313 = vmatpush1.msra.mxu0 %v119
  %314 = vmatprep.subr.mxu0 0.0
  %315 = vmatpush1.msra.mxu0 %v120
  %316 = vmatprep.subr.mxu0 0.0
  %317 = vmatpush1.msra.mxu0 %v121
  %318 = vmatprep.subr.mxu0 0.0
  %319 = vmatpush1.msra.mxu0 %v122
  %320 = vmatprep.subr.mxu0 0.0
  %321 = vmatpush1.msra.mxu0 %v123
  %322 = vmatprep.subr.mxu0 0.0
  %323 = vmatpush1.msra.mxu0 %v124
  %324 = vmatprep.subr.mxu0 0.0
  %325 = vmatpush1.msra.mxu0 %v125
  %326 = vmatprep.subr.mxu0 0.0
  %327 = vmatpush1.msra.mxu0 %v126
  %328 = vmatprep.subr.mxu0 0.0
  %329 = vmatpush1.msra.mxu0 %v127
  %330 = vmatprep.subr.mxu0 0.0
  %331 = vmatpush1.msra.mxu0 %v128
  %332 = vmatprep.subr.mxu0 0.0
  %333 = vmatpush1.msra.mxu0 %v129
  %334 = vmatprep.subr.mxu0 0.0
  %335 = vmatpush1.msra.mxu0 %v130
  %336 = vmatprep.subr.mxu0 0.0
  %337 = vmatpush1.msra.mxu0 %v131
  %338 = vmatprep.subr.mxu0 0.0
  %339 = vmatpush1.msra.mxu0 %v132
  %340 = vmatprep.subr.mxu0 0.0
  %341 = vmatpush1.msra.mxu0 %v133
  %342 = vmatprep.subr.mxu0 0.0
  %343 = vmatpush1.msra.mxu0 %v134
  %344 = vmatprep.subr.mxu0 0.0
  %345 = vmatpush1.msra.mxu0 %v135
  %346 = vmatprep.subr.mxu0 0.0
  %347 = vmatpush1.msra.mxu0 %v136
  %348 = vmatprep.subr.mxu0 0.0
  %349 = vmatpush1.msra.mxu0 %v137
  %350 = vmatprep.subr.mxu0 0.0
  %351 = vmatpush1.msra.mxu0 %v138
  %352 = vmatprep.subr.mxu0 0.0
  %353 = vmatpush1.msra.mxu0 %v139
  %354 = vmatprep.subr.mxu0 0.0
  %355 = vmatpush1.msra.mxu0 %v140
  %356 = vmatprep.subr.mxu0 0.0
  %357 = vmatpush1.msra.mxu0 %v141
  %358 = vmatprep.mubr.f32.mxu0 %v17
  %359 = vmatmul.mubr.f32.gmra.mrb[0].mxu0 %v16
  %v360 = vpop.f32.mrb[0].mxu0
  %v361 = vadd.f32 %v216, %v360
  %v362 = vpop.f32.mrb[0].mxu0
  %363 = vmatprep.mubr.f32.mxu0 %v21
  %364 = vmatmul.mubr.f32.gmra.mrb[0].mxu0 %v20
  %v365 = vpop.f32.mrb[0].mxu0
  %v366 = vadd.f32 %v221, %v365
  %v367 = vpop.f32.mrb[0].mxu0
  %368 = vmatprep.mubr.f32.mxu0 %v25
  %369 = vmatmul.mubr.f32.gmra.mrb[0].mxu0 %v24
  %v370 = vpop.f32.mrb[0].mxu0
  %v371 = vadd.f32 %v226, %v370
  %v372 = vpop.f32.mrb[0].mxu0
  %373 = vmatprep.mubr.f32.mxu0 %v29
  %374 = vmatmul.mubr.f32.gmra.mrb[0].mxu0 %v28
  %v375 = vpop.f32.mrb[0].mxu0
  %v376 = vadd.f32 %v231, %v375
  %v377 = vpop.f32.mrb[0].mxu0
  %378 = vmatprep.mubr.f32.mxu0 %v33
  %379 = vmatmul.mubr.f32.gmra.mrb[0].mxu0 %v32
  %v380 = vpop.f32.mrb[0].mxu0
  %v381 = vadd.f32 %v236, %v380
  %v382 = vpop.f32.mrb[0].mxu0
  %383 = vmatprep.mubr.f32.mxu0 %v37
  %384 = vmatmul.mubr.f32.gmra.mrb[0].mxu0 %v36
  %v385 = vpop.f32.mrb[0].mxu0
  %v386 = vadd.f32 %v241, %v385
  %v387 = vpop.f32.mrb[0].mxu0
  %388 = vmatprep.mubr.f32.mxu0 %v41
  %389 = vmatmul.mubr.f32.gmra.mrb[0].mxu0 %v40
  %v390 = vpop.f32.mrb[0].mxu0
  %v391 = vadd.f32 %v246, %v390
  %v392 = vpop.f32.mrb[0].mxu0
  %393 = vmatprep.mubr.f32.mxu0 %v45
  %394 = vmatmul.mubr.f32.gmra.mrb[0].mxu0 %v44
  %v395 = vpop.f32.mrb[0].mxu0
  %v396 = vadd.f32 %v251, %v395
  %v397 = vpop.f32.mrb[0].mxu0
  %398 = vmatprep.mubr.f32.mxu0 %v49
  %399 = vmatmul.mubr.f32.gmra.mrb[0].mxu0 %v48
  %v400 = vpop.f32.mrb[0].mxu0
  %v401 = vadd.f32 %v256, %v400
  %v402 = vpop.f32.mrb[0].mxu0
  %403 = vmatprep.mubr.f32.mxu0 %v53
  %404 = vmatmul.mubr.f32.gmra.mrb[0].mxu0 %v52
  %v405 = vpop.f32.mrb[0].mxu0
  %v406 = vadd.f32 %v261, %v405
  %v407 = vpop.f32.mrb[0].mxu0
  %408 = vmatprep.mubr.f32.mxu0 %v57
  %409 = vmatmul.mubr.f32.gmra.mrb[0].mxu0 %v56
  %v410 = vpop.f32.mrb[0].mxu0
  %v411 = vadd.f32 %v266, %v410
  %v412 = vpop.f32.mrb[0].mxu0
  %413 = vmatprep.mubr.f32.mxu0 %v61
  %414 = vmatmul.mubr.f32.gmra.mrb[0].mxu0 %v60
  %v415 = vpop.f32.mrb[0].mxu0
  %v416 = vadd.f32 %v271, %v415
  %v417 = vpop.f32.mrb[0].mxu0
  %418 = vmatprep.mubr.f32.mxu0 %v65
  %419 = vmatmul.mubr.f32.gmra.mrb[0].mxu0 %v64
  %v420 = vpop.f32.mrb[0].mxu0
  %v421 = vadd.f32 %v276, %v420
  %v422 = vpop.f32.mrb[0].mxu0
  %423 = vmatprep.mubr.f32.mxu0 %v69
  %424 = vmatmul.mubr.f32.gmra.mrb[0].mxu0 %v68
  %v425 = vpop.f32.mrb[0].mxu0
  %v426 = vadd.f32 %v281, %v425
  %v427 = vpop.f32.mrb[0].mxu0
  %428 = vmatprep.mubr.f32.mxu0 %v73
  %429 = vmatmul.mubr.f32.gmra.mrb[0].mxu0 %v72
  %v430 = vpop.f32.mrb[0].mxu0
  %v431 = vadd.f32 %v286, %v430
  %v432 = vpop.f32.mrb[0].mxu0
  %433 = vmatprep.mubr.f32.mxu0 %v77
  %434 = vmatmul.mubr.f32.gmra.mrb[0].mxu0 %v76
  %v435 = vpop.f32.mrb[0].mxu0
  %v436 = vadd.f32 %v291, %v435
  %v437 = vpop.f32.mrb[0].mxu0
  %438 = vdwg.mxu0
  %v439 = vmax.f32 %v361, 0.0
  %v440 = vmax.f32 %v366, 0.0
  %v441 = vmax.f32 %v371, 0.0
  %v442 = vmax.f32 %v376, 0.0
  %v443 = vmax.f32 %v381, 0.0
  %v444 = vmax.f32 %v386, 0.0
  %v445 = vmax.f32 %v391, 0.0
  %v446 = vmax.f32 %v396, 0.0
  %v447 = vmax.f32 %v401, 0.0
  %v448 = vmax.f32 %v406, 0.0
  %v449 = vmax.f32 %v411, 0.0
  %v450 = vmax.f32 %v416, 0.0
  %v451 = vmax.f32 %v421, 0.0
  %v452 = vmax.f32 %v426, 0.0
  %v453 = vmax.f32 %v431, 0.0
  %v454 = vmax.f32 %v436, 0.0
  %vm455 = vcmask 261120
  %456 = vst.msk [vmem:[%s3] sm:$0xff] %vm455, %v439
  %457 = vst.msk [vmem:[%s3 + $0x8] sm:$0xff] %vm455, %v440
  %458 = vst.msk [vmem:[%s3 + $0x10] sm:$0xff] %vm455, %v441
  %459 = vst.msk [vmem:[%s3 + $0x18] sm:$0xff] %vm455, %v442
  %460 = vst.msk [vmem:[%s3 + $0x20] sm:$0xff] %vm455, %v443
  %461 = vst.msk [vmem:[%s3 + $0x28] sm:$0xff] %vm455, %v444
  %462 = vst.msk [vmem:[%s3 + $0x30] sm:$0xff] %vm455, %v445
  %463 = vst.msk [vmem:[%s3 + $0x38] sm:$0xff] %vm455, %v446
  %464 = vst.msk [vmem:[%s3 + $0x40] sm:$0xff] %vm455, %v447
  %465 = vst.msk [vmem:[%s3 + $0x48] sm:$0xff] %vm455, %v448
  %466 = vst.msk [vmem:[%s3 + $0x50] sm:$0xff] %vm455, %v449
  %467 = vst.msk [vmem:[%s3 + $0x58] sm:$0xff] %vm455, %v450
  %468 = vst.msk [vmem:[%s3 + $0x60] sm:$0xff] %vm455, %v451
  %469 = vst.msk [vmem:[%s3 + $0x68] sm:$0xff] %vm455, %v452
  %470 = vst.msk [vmem:[%s3 + $0x70] sm:$0xff] %vm455, %v453
  %471 = vst.msk [vmem:[%s3 + $0x78] sm:$0xff] %vm455, %v454
  // Predicated region
  $region14: #{encoder_forward.5} parent=0 // pred_check
    _
  $region15: #{encoder_forward.5} parent=0 // pred_check_branch
    %473 = sbr.rel (0) target = $region17
  $region16: #{encoder_forward.5} parent=0 // pred_region
    _
  $region17: #{encoder_forward.5} parent=0 // pred_fallthru
    _
  // Predicated region
  $region18: #{encoder_forward.5} parent=0 // pred_check
    _
  $region19: #{encoder_forward.5} parent=0 // pred_check_branch
    %475 = sbr.rel (0) target = $region21
  $region20: #{encoder_forward.5} parent=0 // pred_region
    _
  $region21: #{encoder_forward.5} parent=0 // pred_fallthru
    _

// kernel: encoder_forward.6
$region0: #{encoder_forward.6}
  #allocation0 [shape = 'u32[]', space=smem, size = 0x4, offset = 0x4, fixed_abs, tag = 'smem constant byte address 0x4 - core index']
  #allocation1 [shape = 'u32[144,128]{1,0:T(1,128)}', space=vmem, size = 0x12000, scoped, tag = 'internal scratch']
  %s0 = inlined_call_operand.vmem [shape: f32[32,512], index: 0, kind: input, shape index: {}]
  %s1 = inlined_call_operand.vmem [shape: f32[512,32], index: 1, kind: input, shape index: {}]
  %s2 = inlined_call_operand.vmem [shape: f32[1,32], index: 2, kind: input, shape index: {}]
  %s3 = inlined_call_operand.vmem [shape: f32[32,32], index: 3, kind: output, shape index: {}]
  %s4 = sld [smem:[#allocation0]]
  $region22: #{encoder_forward.6} parent=0
    _
  %s6 = ssub.s32 1, %s4
  %s7 = scalar_select 0, %s6, %s4
  // Predicated region
  $region2: #{encoder_forward.6} parent=0 // pred_check
    _
  $region3: #{encoder_forward.6} parent=0 // pred_check_branch
    %9 = sbr.rel (0) target = $region5
  $region4: #{encoder_forward.6} parent=0 // pred_region
    _
  $region5: #{encoder_forward.6} parent=0 // pred_fallthru
    _
  // Predicated region
  $region6: #{encoder_forward.6} parent=0 // pred_check
    _
  $region7: #{encoder_forward.6} parent=0 // pred_check_branch
    %11 = sbr.rel (0) target = $region9
  $region8: #{encoder_forward.6} parent=0 // pred_region
    _
  $region9: #{encoder_forward.6} parent=0 // pred_fallthru
    _
  // Predicated region
  $region10: #{encoder_forward.6} parent=0 // pred_check
    _
  $region11: #{encoder_forward.6} parent=0 // pred_check_branch
    %13 = sbr.rel (0) target = $region13
  $region12: #{encoder_forward.6} parent=0 // pred_region
    _
  $region13: #{encoder_forward.6} parent=0 // pred_fallthru
    _
  %v14 = vld [vmem:[%s0] sm:$0xff]
  %v15 = vld [vmem:[%s0 + $0x8] sm:$0xff]
  %v16 = vld [vmem:[%s0 + $0x10] sm:$0xff]
  %v17 = vld [vmem:[%s0 + $0x18] sm:$0xff]
  %v18 = vld [vmem:[%s0 + $0x20] sm:$0xff]
  %v19 = vld [vmem:[%s0 + $0x28] sm:$0xff]
  %v20 = vld [vmem:[%s0 + $0x30] sm:$0xff]
  %v21 = vld [vmem:[%s0 + $0x38] sm:$0xff]
  %v22 = vld [vmem:[%s0 + $0x40] sm:$0xff]
  %v23 = vld [vmem:[%s0 + $0x48] sm:$0xff]
  %v24 = vld [vmem:[%s0 + $0x50] sm:$0xff]
  %v25 = vld [vmem:[%s0 + $0x58] sm:$0xff]
  %v26 = vld [vmem:[%s0 + $0x60] sm:$0xff]
  %v27 = vld [vmem:[%s0 + $0x68] sm:$0xff]
  %v28 = vld [vmem:[%s0 + $0x70] sm:$0xff]
  %v29 = vld [vmem:[%s0 + $0x78] sm:$0xff]
  %v30 = vld [vmem:[%s1] sm:$0xff]
  %v31 = vld [vmem:[%s1 + $0x8] sm:$0xff]
  %v32 = vld [vmem:[%s1 + $0x10] sm:$0xff]
  %v33 = vld [vmem:[%s1 + $0x18] sm:$0xff]
  %v34 = vld [vmem:[%s1 + $0x20] sm:$0xff]
  %v35 = vld [vmem:[%s1 + $0x28] sm:$0xff]
  %v36 = vld [vmem:[%s1 + $0x30] sm:$0xff]
  %v37 = vld [vmem:[%s1 + $0x38] sm:$0xff]
  %v38 = vld [vmem:[%s1 + $0x40] sm:$0xff]
  %v39 = vld [vmem:[%s1 + $0x48] sm:$0xff]
  %v40 = vld [vmem:[%s1 + $0x50] sm:$0xff]
  %v41 = vld [vmem:[%s1 + $0x58] sm:$0xff]
  %v42 = vld [vmem:[%s1 + $0x60] sm:$0xff]
  %v43 = vld [vmem:[%s1 + $0x68] sm:$0xff]
  %v44 = vld [vmem:[%s1 + $0x70] sm:$0xff]
  %v45 = vld [vmem:[%s1 + $0x78] sm:$0xff]
  %v46 = vld [vmem:[%s1 + $0x80] sm:$0xff]
  %v47 = vld [vmem:[%s1 + $0x88] sm:$0xff]
  %v48 = vld [vmem:[%s1 + $0x90] sm:$0xff]
  %v49 = vld [vmem:[%s1 + $0x98] sm:$0xff]
  %v50 = vld [vmem:[%s1 + $0xa0] sm:$0xff]
  %v51 = vld [vmem:[%s1 + $0xa8] sm:$0xff]
  %v52 = vld [vmem:[%s1 + $0xb0] sm:$0xff]
  %v53 = vld [vmem:[%s1 + $0xb8] sm:$0xff]
  %v54 = vld [vmem:[%s1 + $0xc0] sm:$0xff]
  %v55 = vld [vmem:[%s1 + $0xc8] sm:$0xff]
  %v56 = vld [vmem:[%s1 + $0xd0] sm:$0xff]
  %v57 = vld [vmem:[%s1 + $0xd8] sm:$0xff]
  %v58 = vld [vmem:[%s1 + $0xe0] sm:$0xff]
  %v59 = vld [vmem:[%s1 + $0xe8] sm:$0xff]
  %v60 = vld [vmem:[%s1 + $0xf0] sm:$0xff]
  %v61 = vld [vmem:[%s1 + $0xf8] sm:$0xff]
  %v62 = vld [vmem:[%s1 + $0x100] sm:$0xff]
  %v63 = vld [vmem:[%s1 + $0x108] sm:$0xff]
  %v64 = vld [vmem:[%s1 + $0x110] sm:$0xff]
  %v65 = vld [vmem:[%s1 + $0x118] sm:$0xff]
  %v66 = vld [vmem:[%s1 + $0x120] sm:$0xff]
  %v67 = vld [vmem:[%s1 + $0x128] sm:$0xff]
  %v68 = vld [vmem:[%s1 + $0x130] sm:$0xff]
  %v69 = vld [vmem:[%s1 + $0x138] sm:$0xff]
  %v70 = vld [vmem:[%s1 + $0x140] sm:$0xff]
  %v71 = vld [vmem:[%s1 + $0x148] sm:$0xff]
  %v72 = vld [vmem:[%s1 + $0x150] sm:$0xff]
  %v73 = vld [vmem:[%s1 + $0x158] sm:$0xff]
  %v74 = vld [vmem:[%s1 + $0x160] sm:$0xff]
  %v75 = vld [vmem:[%s1 + $0x168] sm:$0xff]
  %v76 = vld [vmem:[%s1 + $0x170] sm:$0xff]
  %v77 = vld [vmem:[%s1 + $0x178] sm:$0xff]
  %v78 = vld [vmem:[%s1 + $0x180] sm:$0xff]
  %v79 = vld [vmem:[%s1 + $0x188] sm:$0xff]
  %v80 = vld [vmem:[%s1 + $0x190] sm:$0xff]
  %v81 = vld [vmem:[%s1 + $0x198] sm:$0xff]
  %v82 = vld [vmem:[%s1 + $0x1a0] sm:$0xff]
  %v83 = vld [vmem:[%s1 + $0x1a8] sm:$0xff]
  %v84 = vld [vmem:[%s1 + $0x1b0] sm:$0xff]
  %v85 = vld [vmem:[%s1 + $0x1b8] sm:$0xff]
  %v86 = vld [vmem:[%s1 + $0x1c0] sm:$0xff]
  %v87 = vld [vmem:[%s1 + $0x1c8] sm:$0xff]
  %v88 = vld [vmem:[%s1 + $0x1d0] sm:$0xff]
  %v89 = vld [vmem:[%s1 + $0x1d8] sm:$0xff]
  %v90 = vld [vmem:[%s1 + $0x1e0] sm:$0xff]
  %v91 = vld [vmem:[%s1 + $0x1e8] sm:$0xff]
  %v92 = vld [vmem:[%s1 + $0x1f0] sm:$0xff]
  %v93 = vld [vmem:[%s1 + $0x1f8] sm:$0xff]
  %v94 = vld [vmem:[%s2] sm:$0x1]
  %v96 = vlaneseq
  %v97 = vshrl.u32 %v96, 7
  %v98 = vsub.s32 0, %v97
  %v99 = vrot.slane %v94, %v98
  %101 = vmatprep.subr.mxu0 0.0
  %102 = vmatpush1.msra.mxu0 %v30
  %103 = vmatprep.subr.mxu0 0.0
  %104 = vmatpush1.msra.mxu0 %v31
  %105 = vmatprep.subr.mxu0 0.0
  %106 = vmatpush1.msra.mxu0 %v32
  %107 = vmatprep.subr.mxu0 0.0
  %108 = vmatpush1.msra.mxu0 %v33
  %109 = vmatprep.subr.mxu0 0.0
  %110 = vmatpush1.msra.mxu0 %v34
  %111 = vmatprep.subr.mxu0 0.0
  %112 = vmatpush1.msra.mxu0 %v35
  %113 = vmatprep.subr.mxu0 0.0
  %114 = vmatpush1.msra.mxu0 %v36
  %115 = vmatprep.subr.mxu0 0.0
  %116 = vmatpush1.msra.mxu0 %v37
  %117 = vmatprep.subr.mxu0 0.0
  %118 = vmatpush1.msra.mxu0 %v38
  %119 = vmatprep.subr.mxu0 0.0
  %120 = vmatpush1.msra.mxu0 %v39
  %121 = vmatprep.subr.mxu0 0.0
  %122 = vmatpush1.msra.mxu0 %v40
  %123 = vmatprep.subr.mxu0 0.0
  %124 = vmatpush1.msra.mxu0 %v41
  %125 = vmatprep.subr.mxu0 0.0
  %126 = vmatpush1.msra.mxu0 %v42
  %127 = vmatprep.subr.mxu0 0.0
  %128 = vmatpush1.msra.mxu0 %v43
  %129 = vmatprep.subr.mxu0 0.0
  %130 = vmatpush1.msra.mxu0 %v44
  %131 = vmatprep.subr.mxu0 0.0
  %132 = vmatpush1.msra.mxu0 %v45
  %133 = vmatprep.subr.mxu0 0.0
  %134 = vmatpush1.msra.mxu0 %v46
  %135 = vmatprep.subr.mxu0 0.0
  %136 = vmatpush1.msra.mxu0 %v47
  %137 = vmatprep.subr.mxu0 0.0
  %138 = vmatpush1.msra.mxu0 %v48
  %139 = vmatprep.subr.mxu0 0.0
  %140 = vmatpush1.msra.mxu0 %v49
  %141 = vmatprep.subr.mxu0 0.0
  %142 = vmatpush1.msra.mxu0 %v50
  %143 = vmatprep.subr.mxu0 0.0
  %144 = vmatpush1.msra.mxu0 %v51
  %145 = vmatprep.subr.mxu0 0.0
  %146 = vmatpush1.msra.mxu0 %v52
  %147 = vmatprep.subr.mxu0 0.0
  %148 = vmatpush1.msra.mxu0 %v53
  %149 = vmatprep.subr.mxu0 0.0
  %150 = vmatpush1.msra.mxu0 %v54
  %151 = vmatprep.subr.mxu0 0.0
  %152 = vmatpush1.msra.mxu0 %v55
  %153 = vmatprep.subr.mxu0 0.0
  %154 = vmatpush1.msra.mxu0 %v56
  %155 = vmatprep.subr.mxu0 0.0
  %156 = vmatpush1.msra.mxu0 %v57
  %157 = vmatprep.subr.mxu0 0.0
  %158 = vmatpush1.msra.mxu0 %v58
  %159 = vmatprep.subr.mxu0 0.0
  %160 = vmatpush1.msra.mxu0 %v59
  %161 = vmatprep.subr.mxu0 0.0
  %162 = vmatpush1.msra.mxu0 %v60
  %163 = vmatprep.subr.mxu0 0.0
  %164 = vmatpush1.msra.mxu0 %v61
  %165 = vmatprep.mubr.f32.mxu0 %v15
  %166 = vmatmul.mubr.f32.gmra.mrb[0].mxu0 %v14
  %v167 = vpop.f32.mrb[0].mxu0
  %v168 = vadd.f32 %v99, %v167
  %v169 = vpop.f32.mrb[0].mxu0
  %170 = vmatprep.mubr.f32.mxu0 %v19
  %171 = vmatmul.mubr.f32.gmra.mrb[0].mxu0 %v18
  %v172 = vpop.f32.mrb[0].mxu0
  %v173 = vadd.f32 %v99, %v172
  %v174 = vpop.f32.mrb[0].mxu0
  %175 = vmatprep.mubr.f32.mxu0 %v23
  %176 = vmatmul.mubr.f32.gmra.mrb[0].mxu0 %v22
  %v177 = vpop.f32.mrb[0].mxu0
  %v178 = vadd.f32 %v99, %v177
  %v179 = vpop.f32.mrb[0].mxu0
  %180 = vmatprep.mubr.f32.mxu0 %v27
  %181 = vmatmul.mubr.f32.gmra.mrb[0].mxu0 %v26
  %v182 = vpop.f32.mrb[0].mxu0
  %v183 = vadd.f32 %v99, %v182
  %v184 = vpop.f32.mrb[0].mxu0
  %185 = vdwg.mxu0
  %186 = vmatprep.subr.mxu0 0.0
  %187 = vmatpush1.msra.mxu0 %v62
  %188 = vmatprep.subr.mxu0 0.0
  %189 = vmatpush1.msra.mxu0 %v63
  %190 = vmatprep.subr.mxu0 0.0
  %191 = vmatpush1.msra.mxu0 %v64
  %192 = vmatprep.subr.mxu0 0.0
  %193 = vmatpush1.msra.mxu0 %v65
  %194 = vmatprep.subr.mxu0 0.0
  %195 = vmatpush1.msra.mxu0 %v66
  %196 = vmatprep.subr.mxu0 0.0
  %197 = vmatpush1.msra.mxu0 %v67
  %198 = vmatprep.subr.mxu0 0.0
  %199 = vmatpush1.msra.mxu0 %v68
  %200 = vmatprep.subr.mxu0 0.0
  %201 = vmatpush1.msra.mxu0 %v69
  %202 = vmatprep.subr.mxu0 0.0
  %203 = vmatpush1.msra.mxu0 %v70
  %204 = vmatprep.subr.mxu0 0.0
  %205 = vmatpush1.msra.mxu0 %v71
  %206 = vmatprep.subr.mxu0 0.0
  %207 = vmatpush1.msra.mxu0 %v72
  %208 = vmatprep.subr.mxu0 0.0
  %209 = vmatpush1.msra.mxu0 %v73
  %210 = vmatprep.subr.mxu0 0.0
  %211 = vmatpush1.msra.mxu0 %v74
  %212 = vmatprep.subr.mxu0 0.0
  %213 = vmatpush1.msra.mxu0 %v75
  %214 = vmatprep.subr.mxu0 0.0
  %215 = vmatpush1.msra.mxu0 %v76
  %216 = vmatprep.subr.mxu0 0.0
  %217 = vmatpush1.msra.mxu0 %v77
  %218 = vmatprep.subr.mxu0 0.0
  %219 = vmatpush1.msra.mxu0 %v78
  %220 = vmatprep.subr.mxu0 0.0
  %221 = vmatpush1.msra.mxu0 %v79
  %222 = vmatprep.subr.mxu0 0.0
  %223 = vmatpush1.msra.mxu0 %v80
  %224 = vmatprep.subr.mxu0 0.0
  %225 = vmatpush1.msra.mxu0 %v81
  %226 = vmatprep.subr.mxu0 0.0
  %227 = vmatpush1.msra.mxu0 %v82
  %228 = vmatprep.subr.mxu0 0.0
  %229 = vmatpush1.msra.mxu0 %v83
  %230 = vmatprep.subr.mxu0 0.0
  %231 = vmatpush1.msra.mxu0 %v84
  %232 = vmatprep.subr.mxu0 0.0
  %233 = vmatpush1.msra.mxu0 %v85
  %234 = vmatprep.subr.mxu0 0.0
  %235 = vmatpush1.msra.mxu0 %v86
  %236 = vmatprep.subr.mxu0 0.0
  %237 = vmatpush1.msra.mxu0 %v87
  %238 = vmatprep.subr.mxu0 0.0
  %239 = vmatpush1.msra.mxu0 %v88
  %240 = vmatprep.subr.mxu0 0.0
  %241 = vmatpush1.msra.mxu0 %v89
  %242 = vmatprep.subr.mxu0 0.0
  %243 = vmatpush1.msra.mxu0 %v90
  %244 = vmatprep.subr.mxu0 0.0
  %245 = vmatpush1.msra.mxu0 %v91
  %246 = vmatprep.subr.mxu0 0.0
  %247 = vmatpush1.msra.mxu0 %v92
  %248 = vmatprep.subr.mxu0 0.0
  %249 = vmatpush1.msra.mxu0 %v93
  %250 = vmatprep.mubr.f32.mxu0 %v17
  %251 = vmatmul.mubr.f32.gmra.mrb[0].mxu0 %v16
  %v252 = vpop.f32.mrb[0].mxu0
  %v253 = vadd.f32 %v168, %v252
  %v254 = vpop.f32.mrb[0].mxu0
  %255 = vmatprep.mubr.f32.mxu0 %v21
  %256 = vmatmul.mubr.f32.gmra.mrb[0].mxu0 %v20
  %v257 = vpop.f32.mrb[0].mxu0
  %v258 = vadd.f32 %v173, %v257
  %v259 = vpop.f32.mrb[0].mxu0
  %260 = vmatprep.mubr.f32.mxu0 %v25
  %261 = vmatmul.mubr.f32.gmra.mrb[0].mxu0 %v24
  %v262 = vpop.f32.mrb[0].mxu0
  %v263 = vadd.f32 %v178, %v262
  %v264 = vpop.f32.mrb[0].mxu0
  %265 = vmatprep.mubr.f32.mxu0 %v29
  %266 = vmatmul.mubr.f32.gmra.mrb[0].mxu0 %v28
  %v267 = vpop.f32.mrb[0].mxu0
  %v268 = vadd.f32 %v183, %v267
  %v269 = vpop.f32.mrb[0].mxu0
  %270 = vdwg.mxu0
  %v271 = vmax.f32 %v253, 0.0
  %v272 = vmax.f32 %v258, 0.0
  %v273 = vmax.f32 %v263, 0.0
  %v274 = vmax.f32 %v268, 0.0
  %vm275 = vcmask 261120
  %276 = vst.msk [vmem:[%s3] sm:$0xff] %vm275, %v271
  %277 = vst.msk [vmem:[%s3 + $0x8] sm:$0xff] %vm275, %v272
  %278 = vst.msk [vmem:[%s3 + $0x10] sm:$0xff] %vm275, %v273
  %279 = vst.msk [vmem:[%s3 + $0x18] sm:$0xff] %vm275, %v274
  // Predicated region
  $region14: #{encoder_forward.6} parent=0 // pred_check
    _
  $region15: #{encoder_forward.6} parent=0 // pred_check_branch
    %281 = sbr.rel (0) target = $region17
  $region16: #{encoder_forward.6} parent=0 // pred_region
    _
  $region17: #{encoder_forward.6} parent=0 // pred_fallthru
    _
  // Predicated region
  $region18: #{encoder_forward.6} parent=0 // pred_check
    _
  $region19: #{encoder_forward.6} parent=0 // pred_check_branch
    %283 = sbr.rel (0) target = $region21
  $region20: #{encoder_forward.6} parent=0 // pred_region
    _
  $region21: #{encoder_forward.6} parent=0 // pred_fallthru
    _

// kernel: encoder_forward.7
$region0: #{encoder_forward.7}
  #allocation0 [shape = 'u32[]', space=smem, size = 0x4, offset = 0x4, fixed_abs, tag = 'smem constant byte address 0x4 - core index']
  #allocation1 [shape = 'u32[144,128]{1,0:T(1,128)}', space=vmem, size = 0x12000, scoped, tag = 'internal scratch']
  %s0 = inlined_call_operand.vmem [shape: f32[2,512], index: 0, kind: input, shape index: {}]
  %s1 = inlined_call_operand.vmem [shape: f32[512,256], index: 1, kind: input, shape index: {}]
  %s2 = inlined_call_operand.vmem [shape: f32[1,256], index: 2, kind: input, shape index: {}]
  %s3 = inlined_call_operand.vmem [shape: f32[256,256], index: 3, kind: input, shape index: {}]
  %s4 = inlined_call_operand.vmem [shape: f32[1,256], index: 4, kind: input, shape index: {}]
  %s5 = inlined_call_operand.vmem [shape: f32[256,128], index: 5, kind: input, shape index: {}]
  %s6 = inlined_call_operand.vmem [shape: f32[1,128], index: 6, kind: input, shape index: {}]
  %s7 = inlined_call_operand.vmem [shape: f32[2,128], index: 7, kind: output, shape index: {}]
  %s8 = sld [smem:[#allocation0]]
  $region38: #{encoder_forward.7} parent=0
    _
  %s10 = ssub.s32 1, %s8
  %s11 = scalar_select 0, %s10, %s8
  // Predicated region
  $region2: #{encoder_forward.7} parent=0 // pred_check
    _
  $region3: #{encoder_forward.7} parent=0 // pred_check_branch
    %13 = sbr.rel (0) target = $region5
  $region4: #{encoder_forward.7} parent=0 // pred_region
    _
  $region5: #{encoder_forward.7} parent=0 // pred_fallthru
    _
  // Predicated region
  $region6: #{encoder_forward.7} parent=0 // pred_check
    _
  $region7: #{encoder_forward.7} parent=0 // pred_check_branch
    %15 = sbr.rel (0) target = $region9
  $region8: #{encoder_forward.7} parent=0 // pred_region
    _
  $region9: #{encoder_forward.7} parent=0 // pred_fallthru
    _
  // Predicated region
  $region10: #{encoder_forward.7} parent=0 // pred_check
    _
  $region11: #{encoder_forward.7} parent=0 // pred_check_branch
    %17 = sbr.rel (0) target = $region13
  $region12: #{encoder_forward.7} parent=0 // pred_region
    _
  $region13: #{encoder_forward.7} parent=0 // pred_fallthru
    _
  // Predicated region
  $region14: #{encoder_forward.7} parent=0 // pred_check
    _
  $region15: #{encoder_forward.7} parent=0 // pred_check_branch
    %19 = sbr.rel (0) target = $region17
  $region16: #{encoder_forward.7} parent=0 // pred_region
    _
  $region17: #{encoder_forward.7} parent=0 // pred_fallthru
    _
  // Predicated region
  $region18: #{encoder_forward.7} parent=0 // pred_check
    _
  $region19: #{encoder_forward.7} parent=0 // pred_check_branch
    %21 = sbr.rel (0) target = $region21
  $region20: #{encoder_forward.7} parent=0 // pred_region
    _
  $region21: #{encoder_forward.7} parent=0 // pred_fallthru
    _
  // Predicated region
  $region22: #{encoder_forward.7} parent=0 // pred_check
    _
  $region23: #{encoder_forward.7} parent=0 // pred_check_branch
    %23 = sbr.rel (0) target = $region25
  $region24: #{encoder_forward.7} parent=0 // pred_region
    _
  $region25: #{encoder_forward.7} parent=0 // pred_fallthru
    _
  // Predicated region
  $region26: #{encoder_forward.7} parent=0 // pred_check
    _
  $region27: #{encoder_forward.7} parent=0 // pred_check_branch
    %25 = sbr.rel (0) target = $region29
  $region28: #{encoder_forward.7} parent=0 // pred_region
    _
  $region29: #{encoder_forward.7} parent=0 // pred_fallthru
    _
  %v26 = vld [vmem:[%s0] sm:$0xff]
  %v27 = vld [vmem:[%s1] sm:$0xff]
  %v28 = vld [vmem:[%s1 + $0x8] sm:$0xff]
  %v29 = vld [vmem:[%s1 + $0x10] sm:$0xff]
  %v30 = vld [vmem:[%s1 + $0x18] sm:$0xff]
  %v31 = vld [vmem:[%s1 + $0x20] sm:$0xff]
  %v32 = vld [vmem:[%s1 + $0x28] sm:$0xff]
  %v33 = vld [vmem:[%s1 + $0x30] sm:$0xff]
  %v34 = vld [vmem:[%s1 + $0x38] sm:$0xff]
  %v35 = vld [vmem:[%s1 + $0x40] sm:$0xff]
  %v36 = vld [vmem:[%s1 + $0x48] sm:$0xff]
  %v37 = vld [vmem:[%s1 + $0x50] sm:$0xff]
  %v38 = vld [vmem:[%s1 + $0x58] sm:$0xff]
  %v39 = vld [vmem:[%s1 + $0x60] sm:$0xff]
  %v40 = vld [vmem:[%s1 + $0x68] sm:$0xff]
  %v41 = vld [vmem:[%s1 + $0x70] sm:$0xff]
  %v42 = vld [vmem:[%s1 + $0x78] sm:$0xff]
  %v43 = vld [vmem:[%s1 + $0x80] sm:$0xff]
  %v44 = vld [vmem:[%s1 + $0x88] sm:$0xff]
  %v45 = vld [vmem:[%s1 + $0x90] sm:$0xff]
  %v46 = vld [vmem:[%s1 + $0x98] sm:$0xff]
  %v47 = vld [vmem:[%s1 + $0xa0] sm:$0xff]
  %v48 = vld [vmem:[%s1 + $0xa8] sm:$0xff]
  %v49 = vld [vmem:[%s1 + $0xb0] sm:$0xff]
  %v50 = vld [vmem:[%s1 + $0xb8] sm:$0xff]
  %v51 = vld [vmem:[%s1 + $0xc0] sm:$0xff]
  %v52 = vld [vmem:[%s1 + $0xc8] sm:$0xff]
  %v53 = vld [vmem:[%s1 + $0xd0] sm:$0xff]
  %v54 = vld [vmem:[%s1 + $0xd8] sm:$0xff]
  %v55 = vld [vmem:[%s1 + $0xe0] sm:$0xff]
  %v56 = vld [vmem:[%s1 + $0xe8] sm:$0xff]
  %v57 = vld [vmem:[%s1 + $0xf0] sm:$0xff]
  %v58 = vld [vmem:[%s1 + $0xf8] sm:$0xff]
  %v59 = vld [vmem:[%s1 + $0x100] sm:$0xff]
  %v60 = vld [vmem:[%s1 + $0x108] sm:$0xff]
  %v61 = vld [vmem:[%s1 + $0x110] sm:$0xff]
  %v62 = vld [vmem:[%s1 + $0x118] sm:$0xff]
  %v63 = vld [vmem:[%s1 + $0x120] sm:$0xff]
  %v64 = vld [vmem:[%s1 + $0x128] sm:$0xff]
  %v65 = vld [vmem:[%s1 + $0x130] sm:$0xff]
  %v66 = vld [vmem:[%s1 + $0x138] sm:$0xff]
  %v67 = vld [vmem:[%s1 + $0x140] sm:$0xff]
  %v68 = vld [vmem:[%s1 + $0x148] sm:$0xff]
  %v69 = vld [vmem:[%s1 + $0x150] sm:$0xff]
  %v70 = vld [vmem:[%s1 + $0x158] sm:$0xff]
  %v71 = vld [vmem:[%s1 + $0x160] sm:$0xff]
  %v72 = vld [vmem:[%s1 + $0x168] sm:$0xff]
  %v73 = vld [vmem:[%s1 + $0x170] sm:$0xff]
  %v74 = vld [vmem:[%s1 + $0x178] sm:$0xff]
  %v75 = vld [vmem:[%s1 + $0x180] sm:$0xff]
  %v76 = vld [vmem:[%s1 + $0x188] sm:$0xff]
  %v77 = vld [vmem:[%s1 + $0x190] sm:$0xff]
  %v78 = vld [vmem:[%s1 + $0x198] sm:$0xff]
  %v79 = vld [vmem:[%s1 + $0x1a0] sm:$0xff]
  %v80 = vld [vmem:[%s1 + $0x1a8] sm:$0xff]
  %v81 = vld [vmem:[%s1 + $0x1b0] sm:$0xff]
  %v82 = vld [vmem:[%s1 + $0x1b8] sm:$0xff]
  %v83 = vld [vmem:[%s1 + $0x1c0] sm:$0xff]
  %v84 = vld [vmem:[%s1 + $0x1c8] sm:$0xff]
  %v85 = vld [vmem:[%s1 + $0x1d0] sm:$0xff]
  %v86 = vld [vmem:[%s1 + $0x1d8] sm:$0xff]
  %v87 = vld [vmem:[%s1 + $0x1e0] sm:$0xff]
  %v88 = vld [vmem:[%s1 + $0x1e8] sm:$0xff]
  %v89 = vld [vmem:[%s1 + $0x1f0] sm:$0xff]
  %v90 = vld [vmem:[%s1 + $0x1f8] sm:$0xff]
  %v91 = vld [vmem:[%s1 + $0x200] sm:$0xff]
  %v92 = vld [vmem:[%s1 + $0x208] sm:$0xff]
  %v93 = vld [vmem:[%s1 + $0x210] sm:$0xff]
  %v94 = vld [vmem:[%s1 + $0x218] sm:$0xff]
  %v95 = vld [vmem:[%s1 + $0x220] sm:$0xff]
  %v96 = vld [vmem:[%s1 + $0x228] sm:$0xff]
  %v97 = vld [vmem:[%s1 + $0x230] sm:$0xff]
  %v98 = vld [vmem:[%s1 + $0x238] sm:$0xff]
  %v99 = vld [vmem:[%s1 + $0x240] sm:$0xff]
  %v100 = vld [vmem:[%s1 + $0x248] sm:$0xff]
  %v101 = vld [vmem:[%s1 + $0x250] sm:$0xff]
  %v102 = vld [vmem:[%s1 + $0x258] sm:$0xff]
  %v103 = vld [vmem:[%s1 + $0x260] sm:$0xff]
  %v104 = vld [vmem:[%s1 + $0x268] sm:$0xff]
  %v105 = vld [vmem:[%s1 + $0x270] sm:$0xff]
  %v106 = vld [vmem:[%s1 + $0x278] sm:$0xff]
  %v107 = vld [vmem:[%s1 + $0x280] sm:$0xff]
  %v108 = vld [vmem:[%s1 + $0x288] sm:$0xff]
  %v109 = vld [vmem:[%s1 + $0x290] sm:$0xff]
  %v110 = vld [vmem:[%s1 + $0x298] sm:$0xff]
  %v111 = vld [vmem:[%s1 + $0x2a0] sm:$0xff]
  %v112 = vld [vmem:[%s1 + $0x2a8] sm:$0xff]
  %v113 = vld [vmem:[%s1 + $0x2b0] sm:$0xff]
  %v114 = vld [vmem:[%s1 + $0x2b8] sm:$0xff]
  %v115 = vld [vmem:[%s1 + $0x2c0] sm:$0xff]
  %v116 = vld [vmem:[%s1 + $0x2c8] sm:$0xff]
  %v117 = vld [vmem:[%s1 + $0x2d0] sm:$0xff]
  %v118 = vld [vmem:[%s1 + $0x2d8] sm:$0xff]
  %v119 = vld [vmem:[%s1 + $0x2e0] sm:$0xff]
  %v120 = vld [vmem:[%s1 + $0x2e8] sm:$0xff]
  %v121 = vld [vmem:[%s1 + $0x2f0] sm:$0xff]
  %v122 = vld [vmem:[%s1 + $0x2f8] sm:$0xff]
  %v123 = vld [vmem:[%s1 + $0x300] sm:$0xff]
  %v124 = vld [vmem:[%s1 + $0x308] sm:$0xff]
  %v125 = vld [vmem:[%s1 + $0x310] sm:$0xff]
  %v126 = vld [vmem:[%s1 + $0x318] sm:$0xff]
  %v127 = vld [vmem:[%s1 + $0x320] sm:$0xff]
  %v128 = vld [vmem:[%s1 + $0x328] sm:$0xff]
  %v129 = vld [vmem:[%s1 + $0x330] sm:$0xff]
  %v130 = vld [vmem:[%s1 + $0x338] sm:$0xff]
  %v131 = vld [vmem:[%s1 + $0x340] sm:$0xff]
  %v132 = vld [vmem:[%s1 + $0x348] sm:$0xff]
  %v133 = vld [vmem:[%s1 + $0x350] sm:$0xff]
  %v134 = vld [vmem:[%s1 + $0x358] sm:$0xff]
  %v135 = vld [vmem:[%s1 + $0x360] sm:$0xff]
  %v136 = vld [vmem:[%s1 + $0x368] sm:$0xff]
  %v137 = vld [vmem:[%s1 + $0x370] sm:$0xff]
  %v138 = vld [vmem:[%s1 + $0x378] sm:$0xff]
  %v139 = vld [vmem:[%s1 + $0x380] sm:$0xff]
  %v140 = vld [vmem:[%s1 + $0x388] sm:$0xff]
  %v141 = vld [vmem:[%s1 + $0x390] sm:$0xff]
  %v142 = vld [vmem:[%s1 + $0x398] sm:$0xff]
  %v143 = vld [vmem:[%s1 + $0x3a0] sm:$0xff]
  %v144 = vld [vmem:[%s1 + $0x3a8] sm:$0xff]
  %v145 = vld [vmem:[%s1 + $0x3b0] sm:$0xff]
  %v146 = vld [vmem:[%s1 + $0x3b8] sm:$0xff]
  %v147 = vld [vmem:[%s1 + $0x3c0] sm:$0xff]
  %v148 = vld [vmem:[%s1 + $0x3c8] sm:$0xff]
  %v149 = vld [vmem:[%s1 + $0x3d0] sm:$0xff]
  %v150 = vld [vmem:[%s1 + $0x3d8] sm:$0xff]
  %v151 = vld [vmem:[%s1 + $0x3e0] sm:$0xff]
  %v152 = vld [vmem:[%s1 + $0x3e8] sm:$0xff]
  %v153 = vld [vmem:[%s1 + $0x3f0] sm:$0xff]
  %v154 = vld [vmem:[%s1 + $0x3f8] sm:$0xff]
  %v155 = vld [vmem:[%s2] sm:$0x3]
  %v157 = vlaneseq
  %v158 = vshrl.u32 %v157, 7
  %v159 = vsub.s32 0, %v158
  %v160 = vrot.slane %v155, %v159
  %v161 = vlaneseq
  %v162 = vshrl.u32 %v161, 7
  %v163 = vsub.s32 1, %v162
  %v164 = vrot.slane %v155, %v163
  %v168 = vcombine.high %v26, %v26
  %v170 = vunpack.c.l.s4 1983009808
  %v171 = vunpack.c.0.s8 %v170
  %v172 = vlaneseq
  %v173 = vshrl.u32 %v172, 7
  %v174 = vsub.s32 %v171, %v173
  %v175 = vrot.slane %v26, %v174
  %v177 = vunpack.c.l.s4 1983009808
  %v178 = vunpack.c.0.s8 %v177
  %v179 = vlaneseq
  %v180 = vshrl.u32 %v179, 7
  %v181 = vsub.s32 %v178, %v180
  %v182 = vrot.slane %v168, %v181
  %v183 = vcombine.high %v175, %v175
  %v184 = vcombine.high %v182, %v182
  %189 = vmatprep.subr.mxu0 %v28
  %190 = vmatpush1.msra.mxu0 %v27
  %191 = vmatprep.subr.mxu0 %v30
  %192 = vmatpush1.msra.mxu0 %v29
  %193 = vmatprep.subr.mxu0 %v32
  %194 = vmatpush1.msra.mxu0 %v31
  %195 = vmatprep.subr.mxu0 %v34
  %196 = vmatpush1.msra.mxu0 %v33
  %197 = vmatprep.subr.mxu0 %v36
  %198 = vmatpush1.msra.mxu0 %v35
  %199 = vmatprep.subr.mxu0 %v38
  %200 = vmatpush1.msra.mxu0 %v37
  %201 = vmatprep.subr.mxu0 %v40
  %202 = vmatpush1.msra.mxu0 %v39
  %203 = vmatprep.subr.mxu0 %v42
  %204 = vmatpush1.msra.mxu0 %v41
  %205 = vmatprep.subr.mxu0 %v44
  %206 = vmatpush1.msra.mxu0 %v43
  %207 = vmatprep.subr.mxu0 %v46
  %208 = vmatpush1.msra.mxu0 %v45
  %209 = vmatprep.subr.mxu0 %v48
  %210 = vmatpush1.msra.mxu0 %v47
  %211 = vmatprep.subr.mxu0 %v50
  %212 = vmatpush1.msra.mxu0 %v49
  %213 = vmatprep.subr.mxu0 %v52
  %214 = vmatpush1.msra.mxu0 %v51
  %215 = vmatprep.subr.mxu0 %v54
  %216 = vmatpush1.msra.mxu0 %v53
  %217 = vmatprep.subr.mxu0 %v56
  %218 = vmatpush1.msra.mxu0 %v55
  %219 = vmatprep.subr.mxu0 %v58
  %220 = vmatpush1.msra.mxu0 %v57
  %221 = vmatprep.subr.mxu0 %v60
  %222 = vmatpush1.msra.mxu0 %v59
  %223 = vmatprep.subr.mxu0 %v62
  %224 = vmatpush1.msra.mxu0 %v61
  %225 = vmatprep.subr.mxu0 %v64
  %226 = vmatpush1.msra.mxu0 %v63
  %227 = vmatprep.subr.mxu0 %v66
  %228 = vmatpush1.msra.mxu0 %v65
  %229 = vmatprep.subr.mxu0 %v68
  %230 = vmatpush1.msra.mxu0 %v67
  %231 = vmatprep.subr.mxu0 %v70
  %232 = vmatpush1.msra.mxu0 %v69
  %233 = vmatprep.subr.mxu0 %v72
  %234 = vmatpush1.msra.mxu0 %v71
  %235 = vmatprep.subr.mxu0 %v74
  %236 = vmatpush1.msra.mxu0 %v73
  %237 = vmatprep.subr.mxu0 %v76
  %238 = vmatpush1.msra.mxu0 %v75
  %239 = vmatprep.subr.mxu0 %v78
  %240 = vmatpush1.msra.mxu0 %v77
  %241 = vmatprep.subr.mxu0 %v80
  %242 = vmatpush1.msra.mxu0 %v79
  %243 = vmatprep.subr.mxu0 %v82
  %244 = vmatpush1.msra.mxu0 %v81
  %245 = vmatprep.subr.mxu0 %v84
  %246 = vmatpush1.msra.mxu0 %v83
  %247 = vmatprep.subr.mxu0 %v86
  %248 = vmatpush1.msra.mxu0 %v85
  %249 = vmatprep.subr.mxu0 %v88
  %250 = vmatpush1.msra.mxu0 %v87
  %251 = vmatprep.subr.mxu0 %v90
  %252 = vmatpush1.msra.mxu0 %v89
  %253 = vmatprep.mubr.f32.mxu0 %v183
  %254 = vmatmul.mubr.f32.gmra.mrb[0].mxu0 %v175
  %v255 = vpop.f32.mrb[0].mxu0
  %v256 = vadd.f32 %v160, %v255
  %v257 = vpop.f32.mrb[0].mxu0
  %v258 = vadd.f32 %v164, %v257
  %259 = vdwg.mxu0
  %260 = vmatprep.subr.mxu0 %v92
  %261 = vmatpush1.msra.mxu0 %v91
  %262 = vmatprep.subr.mxu0 %v94
  %263 = vmatpush1.msra.mxu0 %v93
  %264 = vmatprep.subr.mxu0 %v96
  %265 = vmatpush1.msra.mxu0 %v95
  %266 = vmatprep.subr.mxu0 %v98
  %267 = vmatpush1.msra.mxu0 %v97
  %268 = vmatprep.subr.mxu0 %v100
  %269 = vmatpush1.msra.mxu0 %v99
  %270 = vmatprep.subr.mxu0 %v102
  %271 = vmatpush1.msra.mxu0 %v101
  %272 = vmatprep.subr.mxu0 %v104
  %273 = vmatpush1.msra.mxu0 %v103
  %274 = vmatprep.subr.mxu0 %v106
  %275 = vmatpush1.msra.mxu0 %v105
  %276 = vmatprep.subr.mxu0 %v108
  %277 = vmatpush1.msra.mxu0 %v107
  %278 = vmatprep.subr.mxu0 %v110
  %279 = vmatpush1.msra.mxu0 %v109
  %280 = vmatprep.subr.mxu0 %v112
  %281 = vmatpush1.msra.mxu0 %v111
  %282 = vmatprep.subr.mxu0 %v114
  %283 = vmatpush1.msra.mxu0 %v113
  %284 = vmatprep.subr.mxu0 %v116
  %285 = vmatpush1.msra.mxu0 %v115
  %286 = vmatprep.subr.mxu0 %v118
  %287 = vmatpush1.msra.mxu0 %v117
  %288 = vmatprep.subr.mxu0 %v120
  %289 = vmatpush1.msra.mxu0 %v119
  %290 = vmatprep.subr.mxu0 %v122
  %291 = vmatpush1.msra.mxu0 %v121
  %292 = vmatprep.subr.mxu0 %v124
  %293 = vmatpush1.msra.mxu0 %v123
  %294 = vmatprep.subr.mxu0 %v126
  %295 = vmatpush1.msra.mxu0 %v125
  %296 = vmatprep.subr.mxu0 %v128
  %297 = vmatpush1.msra.mxu0 %v127
  %298 = vmatprep.subr.mxu0 %v130
  %299 = vmatpush1.msra.mxu0 %v129
  %300 = vmatprep.subr.mxu0 %v132
  %301 = vmatpush1.msra.mxu0 %v131
  %302 = vmatprep.subr.mxu0 %v134
  %303 = vmatpush1.msra.mxu0 %v133
  %304 = vmatprep.subr.mxu0 %v136
  %305 = vmatpush1.msra.mxu0 %v135
  %306 = vmatprep.subr.mxu0 %v138
  %307 = vmatpush1.msra.mxu0 %v137
  %308 = vmatprep.subr.mxu0 %v140
  %309 = vmatpush1.msra.mxu0 %v139
  %310 = vmatprep.subr.mxu0 %v142
  %311 = vmatpush1.msra.mxu0 %v141
  %312 = vmatprep.subr.mxu0 %v144
  %313 = vmatpush1.msra.mxu0 %v143
  %314 = vmatprep.subr.mxu0 %v146
  %315 = vmatpush1.msra.mxu0 %v145
  %316 = vmatprep.subr.mxu0 %v148
  %317 = vmatpush1.msra.mxu0 %v147
  %318 = vmatprep.subr.mxu0 %v150
  %319 = vmatpush1.msra.mxu0 %v149
  %320 = vmatprep.subr.mxu0 %v152
  %321 = vmatpush1.msra.mxu0 %v151
  %322 = vmatprep.subr.mxu0 %v154
  %323 = vmatpush1.msra.mxu0 %v153
  %324 = vmatprep.mubr.f32.mxu0 %v184
  %325 = vmatmul.mubr.f32.gmra.mrb[0].mxu0 %v182
  %v326 = vpop.f32.mrb[0].mxu0
  %v327 = vadd.f32 %v256, %v326
  %v328 = vpop.f32.mrb[0].mxu0
  %v329 = vadd.f32 %v258, %v328
  %330 = vdwg.mxu0
  %v331 = vmax.f32 %v327, 0.0
  %v332 = vmax.f32 %v329, 0.0
  %v333 = vld [vmem:[%s3] sm:$0xff]
  %v334 = vld [vmem:[%s3 + $0x8] sm:$0xff]
  %v335 = vld [vmem:[%s3 + $0x10] sm:$0xff]
  %v336 = vld [vmem:[%s3 + $0x18] sm:$0xff]
  %v337 = vld [vmem:[%s3 + $0x20] sm:$0xff]
  %v338 = vld [vmem:[%s3 + $0x28] sm:$0xff]
  %v339 = vld [vmem:[%s3 + $0x30] sm:$0xff]
  %v340 = vld [vmem:[%s3 + $0x38] sm:$0xff]
  %v341 = vld [vmem:[%s3 + $0x40] sm:$0xff]
  %v342 = vld [vmem:[%s3 + $0x48] sm:$0xff]
  %v343 = vld [vmem:[%s3 + $0x50] sm:$0xff]
  %v344 = vld [vmem:[%s3 + $0x58] sm:$0xff]
  %v345 = vld [vmem:[%s3 + $0x60] sm:$0xff]
  %v346 = vld [vmem:[%s3 + $0x68] sm:$0xff]
  %v347 = vld [vmem:[%s3 + $0x70] sm:$0xff]
  %v348 = vld [vmem:[%s3 + $0x78] sm:$0xff]
  %v349 = vld [vmem:[%s3 + $0x80] sm:$0xff]
  %v350 = vld [vmem:[%s3 + $0x88] sm:$0xff]
  %v351 = vld [vmem:[%s3 + $0x90] sm:$0xff]
  %v352 = vld [vmem:[%s3 + $0x98] sm:$0xff]
  %v353 = vld [vmem:[%s3 + $0xa0] sm:$0xff]
  %v354 = vld [vmem:[%s3 + $0xa8] sm:$0xff]
  %v355 = vld [vmem:[%s3 + $0xb0] sm:$0xff]
  %v356 = vld [vmem:[%s3 + $0xb8] sm:$0xff]
  %v357 = vld [vmem:[%s3 + $0xc0] sm:$0xff]
  %v358 = vld [vmem:[%s3 + $0xc8] sm:$0xff]
  %v359 = vld [vmem:[%s3 + $0xd0] sm:$0xff]
  %v360 = vld [vmem:[%s3 + $0xd8] sm:$0xff]
  %v361 = vld [vmem:[%s3 + $0xe0] sm:$0xff]
  %v362 = vld [vmem:[%s3 + $0xe8] sm:$0xff]
  %v363 = vld [vmem:[%s3 + $0xf0] sm:$0xff]
  %v364 = vld [vmem:[%s3 + $0xf8] sm:$0xff]
  %v365 = vld [vmem:[%s3 + $0x100] sm:$0xff]
  %v366 = vld [vmem:[%s3 + $0x108] sm:$0xff]
  %v367 = vld [vmem:[%s3 + $0x110] sm:$0xff]
  %v368 = vld [vmem:[%s3 + $0x118] sm:$0xff]
  %v369 = vld [vmem:[%s3 + $0x120] sm:$0xff]
  %v370 = vld [vmem:[%s3 + $0x128] sm:$0xff]
  %v371 = vld [vmem:[%s3 + $0x130] sm:$0xff]
  %v372 = vld [vmem:[%s3 + $0x138] sm:$0xff]
  %v373 = vld [vmem:[%s3 + $0x140] sm:$0xff]
  %v374 = vld [vmem:[%s3 + $0x148] sm:$0xff]
  %v375 = vld [vmem:[%s3 + $0x150] sm:$0xff]
  %v376 = vld [vmem:[%s3 + $0x158] sm:$0xff]
  %v377 = vld [vmem:[%s3 + $0x160] sm:$0xff]
  %v378 = vld [vmem:[%s3 + $0x168] sm:$0xff]
  %v379 = vld [vmem:[%s3 + $0x170] sm:$0xff]
  %v380 = vld [vmem:[%s3 + $0x178] sm:$0xff]
  %v381 = vld [vmem:[%s3 + $0x180] sm:$0xff]
  %v382 = vld [vmem:[%s3 + $0x188] sm:$0xff]
  %v383 = vld [vmem:[%s3 + $0x190] sm:$0xff]
  %v384 = vld [vmem:[%s3 + $0x198] sm:$0xff]
  %v385 = vld [vmem:[%s3 + $0x1a0] sm:$0xff]
  %v386 = vld [vmem:[%s3 + $0x1a8] sm:$0xff]
  %v387 = vld [vmem:[%s3 + $0x1b0] sm:$0xff]
  %v388 = vld [vmem:[%s3 + $0x1b8] sm:$0xff]
  %v389 = vld [vmem:[%s3 + $0x1c0] sm:$0xff]
  %v390 = vld [vmem:[%s3 + $0x1c8] sm:$0xff]
  %v391 = vld [vmem:[%s3 + $0x1d0] sm:$0xff]
  %v392 = vld [vmem:[%s3 + $0x1d8] sm:$0xff]
  %v393 = vld [vmem:[%s3 + $0x1e0] sm:$0xff]
  %v394 = vld [vmem:[%s3 + $0x1e8] sm:$0xff]
  %v395 = vld [vmem:[%s3 + $0x1f0] sm:$0xff]
  %v396 = vld [vmem:[%s3 + $0x1f8] sm:$0xff]
  %v397 = vld [vmem:[%s4] sm:$0x3]
  %v399 = vlaneseq
  %v400 = vshrl.u32 %v399, 7
  %v401 = vsub.s32 0, %v400
  %v402 = vrot.slane %v397, %v401
  %v403 = vlaneseq
  %v404 = vshrl.u32 %v403, 7
  %v405 = vsub.s32 1, %v404
  %v406 = vrot.slane %v397, %v405
  %409 = vmatprep.subr.mxu0 %v334
  %410 = vmatpush1.msra.mxu0 %v333
  %411 = vmatprep.subr.mxu0 %v336
  %412 = vmatpush1.msra.mxu0 %v335
  %413 = vmatprep.subr.mxu0 %v338
  %414 = vmatpush1.msra.mxu0 %v337
  %415 = vmatprep.subr.mxu0 %v340
  %416 = vmatpush1.msra.mxu0 %v339
  %417 = vmatprep.subr.mxu0 %v342
  %418 = vmatpush1.msra.mxu0 %v341
  %419 = vmatprep.subr.mxu0 %v344
  %420 = vmatpush1.msra.mxu0 %v343
  %421 = vmatprep.subr.mxu0 %v346
  %422 = vmatpush1.msra.mxu0 %v345
  %423 = vmatprep.subr.mxu0 %v348
  %424 = vmatpush1.msra.mxu0 %v347
  %425 = vmatprep.subr.mxu0 %v350
  %426 = vmatpush1.msra.mxu0 %v349
  %427 = vmatprep.subr.mxu0 %v352
  %428 = vmatpush1.msra.mxu0 %v351
  %429 = vmatprep.subr.mxu0 %v354
  %430 = vmatpush1.msra.mxu0 %v353
  %431 = vmatprep.subr.mxu0 %v356
  %432 = vmatpush1.msra.mxu0 %v355
  %433 = vmatprep.subr.mxu0 %v358
  %434 = vmatpush1.msra.mxu0 %v357
  %435 = vmatprep.subr.mxu0 %v360
  %436 = vmatpush1.msra.mxu0 %v359
  %437 = vmatprep.subr.mxu0 %v362
  %438 = vmatpush1.msra.mxu0 %v361
  %439 = vmatprep.subr.mxu0 %v364
  %440 = vmatpush1.msra.mxu0 %v363
  %441 = vmatprep.subr.mxu0 %v366
  %442 = vmatpush1.msra.mxu0 %v365
  %443 = vmatprep.subr.mxu0 %v368
  %444 = vmatpush1.msra.mxu0 %v367
  %445 = vmatprep.subr.mxu0 %v370
  %446 = vmatpush1.msra.mxu0 %v369
  %447 = vmatprep.subr.mxu0 %v372
  %448 = vmatpush1.msra.mxu0 %v371
  %449 = vmatprep.subr.mxu0 %v374
  %450 = vmatpush1.msra.mxu0 %v373
  %451 = vmatprep.subr.mxu0 %v376
  %452 = vmatpush1.msra.mxu0 %v375
  %453 = vmatprep.subr.mxu0 %v378
  %454 = vmatpush1.msra.mxu0 %v377
  %455 = vmatprep.subr.mxu0 %v380
  %456 = vmatpush1.msra.mxu0 %v379
  %457 = vmatprep.subr.mxu0 %v382
  %458 = vmatpush1.msra.mxu0 %v381
  %459 = vmatprep.subr.mxu0 %v384
  %460 = vmatpush1.msra.mxu0 %v383
  %461 = vmatprep.subr.mxu0 %v386
  %462 = vmatpush1.msra.mxu0 %v385
  %463 = vmatprep.subr.mxu0 %v388
  %464 = vmatpush1.msra.mxu0 %v387
  %465 = vmatprep.subr.mxu0 %v390
  %466 = vmatpush1.msra.mxu0 %v389
  %467 = vmatprep.subr.mxu0 %v392
  %468 = vmatpush1.msra.mxu0 %v391
  %469 = vmatprep.subr.mxu0 %v394
  %470 = vmatpush1.msra.mxu0 %v393
  %471 = vmatprep.subr.mxu0 %v396
  %472 = vmatpush1.msra.mxu0 %v395
  %473 = vmatprep.mubr.f32.mxu0 %v332
  %474 = vmatmul.mubr.f32.gmra.mrb[0].mxu0 %v331
  %v475 = vpop.f32.mrb[0].mxu0
  %v476 = vadd.f32 %v402, %v475
  %v477 = vpop.f32.mrb[0].mxu0
  %v478 = vadd.f32 %v406, %v477
  %479 = vdwg.mxu0
  %v480 = vmax.f32 %v476, 0.0
  %v481 = vmax.f32 %v478, 0.0
  %v482 = vld [vmem:[%s5] sm:$0xff]
  %v483 = vld [vmem:[%s5 + $0x8] sm:$0xff]
  %v484 = vld [vmem:[%s5 + $0x10] sm:$0xff]
  %v485 = vld [vmem:[%s5 + $0x18] sm:$0xff]
  %v486 = vld [vmem:[%s5 + $0x20] sm:$0xff]
  %v487 = vld [vmem:[%s5 + $0x28] sm:$0xff]
  %v488 = vld [vmem:[%s5 + $0x30] sm:$0xff]
  %v489 = vld [vmem:[%s5 + $0x38] sm:$0xff]
  %v490 = vld [vmem:[%s5 + $0x40] sm:$0xff]
  %v491 = vld [vmem:[%s5 + $0x48] sm:$0xff]
  %v492 = vld [vmem:[%s5 + $0x50] sm:$0xff]
  %v493 = vld [vmem:[%s5 + $0x58] sm:$0xff]
  %v494 = vld [vmem:[%s5 + $0x60] sm:$0xff]
  %v495 = vld [vmem:[%s5 + $0x68] sm:$0xff]
  %v496 = vld [vmem:[%s5 + $0x70] sm:$0xff]
  %v497 = vld [vmem:[%s5 + $0x78] sm:$0xff]
  %v498 = vld [vmem:[%s5 + $0x80] sm:$0xff]
  %v499 = vld [vmem:[%s5 + $0x88] sm:$0xff]
  %v500 = vld [vmem:[%s5 + $0x90] sm:$0xff]
  %v501 = vld [vmem:[%s5 + $0x98] sm:$0xff]
  %v502 = vld [vmem:[%s5 + $0xa0] sm:$0xff]
  %v503 = vld [vmem:[%s5 + $0xa8] sm:$0xff]
  %v504 = vld [vmem:[%s5 + $0xb0] sm:$0xff]
  %v505 = vld [vmem:[%s5 + $0xb8] sm:$0xff]
  %v506 = vld [vmem:[%s5 + $0xc0] sm:$0xff]
  %v507 = vld [vmem:[%s5 + $0xc8] sm:$0xff]
  %v508 = vld [vmem:[%s5 + $0xd0] sm:$0xff]
  %v509 = vld [vmem:[%s5 + $0xd8] sm:$0xff]
  %v510 = vld [vmem:[%s5 + $0xe0] sm:$0xff]
  %v511 = vld [vmem:[%s5 + $0xe8] sm:$0xff]
  %v512 = vld [vmem:[%s5 + $0xf0] sm:$0xff]
  %v513 = vld [vmem:[%s5 + $0xf8] sm:$0xff]
  %v514 = vld [vmem:[%s6] sm:$0x1]
  %v516 = vlaneseq
  %v517 = vshrl.u32 %v516, 7
  %v518 = vsub.s32 0, %v517
  %v519 = vrot.slane %v514, %v518
  %521 = vmatprep.subr.mxu0 0.0
  %522 = vmatpush1.msra.mxu0 %v482
  %523 = vmatprep.subr.mxu0 0.0
  %524 = vmatpush1.msra.mxu0 %v483
  %525 = vmatprep.subr.mxu0 0.0
  %526 = vmatpush1.msra.mxu0 %v484
  %527 = vmatprep.subr.mxu0 0.0
  %528 = vmatpush1.msra.mxu0 %v485
  %529 = vmatprep.subr.mxu0 0.0
  %530 = vmatpush1.msra.mxu0 %v486
  %531 = vmatprep.subr.mxu0 0.0
  %532 = vmatpush1.msra.mxu0 %v487
  %533 = vmatprep.subr.mxu0 0.0
  %534 = vmatpush1.msra.mxu0 %v488
  %535 = vmatprep.subr.mxu0 0.0
  %536 = vmatpush1.msra.mxu0 %v489
  %537 = vmatprep.subr.mxu0 0.0
  %538 = vmatpush1.msra.mxu0 %v490
  %539 = vmatprep.subr.mxu0 0.0
  %540 = vmatpush1.msra.mxu0 %v491
  %541 = vmatprep.subr.mxu0 0.0
  %542 = vmatpush1.msra.mxu0 %v492
  %543 = vmatprep.subr.mxu0 0.0
  %544 = vmatpush1.msra.mxu0 %v493
  %545 = vmatprep.subr.mxu0 0.0
  %546 = vmatpush1.msra.mxu0 %v494
  %547 = vmatprep.subr.mxu0 0.0
  %548 = vmatpush1.msra.mxu0 %v495
  %549 = vmatprep.subr.mxu0 0.0
  %550 = vmatpush1.msra.mxu0 %v496
  %551 = vmatprep.subr.mxu0 0.0
  %552 = vmatpush1.msra.mxu0 %v497
  %553 = vmatprep.subr.mxu0 0.0
  %554 = vmatpush1.msra.mxu0 %v498
  %555 = vmatprep.subr.mxu0 0.0
  %556 = vmatpush1.msra.mxu0 %v499
  %557 = vmatprep.subr.mxu0 0.0
  %558 = vmatpush1.msra.mxu0 %v500
  %559 = vmatprep.subr.mxu0 0.0
  %560 = vmatpush1.msra.mxu0 %v501
  %561 = vmatprep.subr.mxu0 0.0
  %562 = vmatpush1.msra.mxu0 %v502
  %563 = vmatprep.subr.mxu0 0.0
  %564 = vmatpush1.msra.mxu0 %v503
  %565 = vmatprep.subr.mxu0 0.0
  %566 = vmatpush1.msra.mxu0 %v504
  %567 = vmatprep.subr.mxu0 0.0
  %568 = vmatpush1.msra.mxu0 %v505
  %569 = vmatprep.subr.mxu0 0.0
  %570 = vmatpush1.msra.mxu0 %v506
  %571 = vmatprep.subr.mxu0 0.0
  %572 = vmatpush1.msra.mxu0 %v507
  %573 = vmatprep.subr.mxu0 0.0
  %574 = vmatpush1.msra.mxu0 %v508
  %575 = vmatprep.subr.mxu0 0.0
  %576 = vmatpush1.msra.mxu0 %v509
  %577 = vmatprep.subr.mxu0 0.0
  %578 = vmatpush1.msra.mxu0 %v510
  %579 = vmatprep.subr.mxu0 0.0
  %580 = vmatpush1.msra.mxu0 %v511
  %581 = vmatprep.subr.mxu0 0.0
  %582 = vmatpush1.msra.mxu0 %v512
  %583 = vmatprep.subr.mxu0 0.0
  %584 = vmatpush1.msra.mxu0 %v513
  %585 = vmatprep.mubr.f32.mxu0 %v481
  %586 = vmatmul.mubr.f32.gmra.mrb[0].mxu0 %v480
  %v587 = vpop.f32.mrb[0].mxu0
  %v588 = vadd.f32 %v519, %v587
  %v589 = vpop.f32.mrb[0].mxu0
  %590 = vdwg.mxu0
  %591 = vst [vmem:[%s7] sm:$0x3] %v588
  // Predicated region
  $region30: #{encoder_forward.7} parent=0 // pred_check
    _
  $region31: #{encoder_forward.7} parent=0 // pred_check_branch
    %593 = sbr.rel (0) target = $region33
  $region32: #{encoder_forward.7} parent=0 // pred_region
    _
  $region33: #{encoder_forward.7} parent=0 // pred_fallthru
    _
  // Predicated region
  $region34: #{encoder_forward.7} parent=0 // pred_check
    _
  $region35: #{encoder_forward.7} parent=0 // pred_check_branch
    %595 = sbr.rel (0) target = $region37
  $region36: #{encoder_forward.7} parent=0 // pred_region
    _
  $region37: #{encoder_forward.7} parent=0 // pred_fallthru
    _

</llo_original>
